<compile_context>
chip_gen: v7x
topology: tpu7x:2x2x1
jax: 0.10.0
libtpu: 0.0.40
codegen_flags: <defaults>
</compile_context>

<pallas_src>
import jax
import jax.numpy as jnp
from jax.experimental import pallas as pl
from jax.experimental.pallas import tpu as pltpu

H1 = 512
H2 = 256
NEG_SLOPE = 0.2


def _discriminator_kernel(z_ref, w1_ref, w2_ref, bias_ref, b3_ref, out_ref):
    """One batch tile; fully fused MLP in VMEM (batch on the lane axis)."""
    zb = z_ref[...].astype(jnp.bfloat16)           # [tb, fn]

    b1 = bias_ref[:, 0:1]                           # [H1, 1]
    b2 = bias_ref[0:H2, 1:2]                        # [H2, 1]
    w3 = bias_ref[0:H2, 2:3]                        # [H2, 1]

    # Layer 1: h = W1 @ z^T   ([H1, fn] x [tb, fn] -> [H1, tb], f32 accum)
    h = jnp.einsum("hf,bf->hb", w1_ref[...], zb,
                   preferred_element_type=jnp.float32)
    h = h + b1
    h = jnp.where(h > 0, h, NEG_SLOPE * h)

    # Layer 2: [H2, H1] x [H1, tb] -> [H2, tb]
    h = jnp.dot(w2_ref[...], h.astype(jnp.bfloat16),
                preferred_element_type=jnp.float32)
    h = h + b2
    h = jnp.where(h > 0, h, NEG_SLOPE * h)

    # Layer 3: Linear(256, 1) as VPU multiply + sublane reduction (a 1-wide
    # MXU matmul would waste the array), then sigmoid epilogue.
    o = jnp.sum(h * w3, axis=0, keepdims=True) + b3_ref[0]    # [1, tb]
    out_ref[...] = jax.nn.sigmoid(o).astype(out_ref.dtype)


def _pick_tile(B):
    """Batch tile: multiple of 256, <= 2048, >= 2 grid steps once B > 256."""
    half = -(-B // 2)                      # cdiv(B, 2)
    tb = ((half + 255) // 256) * 256       # round up to a multiple of 256
    return max(256, min(2048, tb))


@jax.jit
def discriminator_forward(z, w1, b1, w2, b2, w3, b3):
    """z: [B, fn] f32; params in PyTorch nn.Linear layout -> validity [B, 1]."""
    B, fn = z.shape
    tb = _pick_tile(B)
    num_tiles = -(-B // tb)
    bp = num_tiles * tb

    # Small one-time operand prep (no pass over the [B, fn] activations).
    w1b = w1.astype(jnp.bfloat16)                       # [H1, fn]
    w2b = w2.astype(jnp.bfloat16)                       # [H2, H1]
    bias_pack = jnp.zeros((H1, 3), jnp.float32)
    bias_pack = bias_pack.at[:, 0].set(b1.astype(jnp.float32))
    bias_pack = bias_pack.at[:H2, 1].set(b2.astype(jnp.float32))
    bias_pack = bias_pack.at[:H2, 2].set(w3.reshape(H2).astype(jnp.float32))
    b3c = b3.reshape(1).astype(jnp.float32)             # SMEM scalar

    out = pl.pallas_call(
        _discriminator_kernel,
        out_shape=jax.ShapeDtypeStruct((1, bp), jnp.float32),
        grid_spec=pltpu.PrefetchScalarGridSpec(
            num_scalar_prefetch=0,
            grid=(num_tiles,),
            in_specs=[
                pl.BlockSpec((tb, fn), lambda i: (i, 0)),        # z, native layout
                pl.BlockSpec((H1, fn), lambda i: (0, 0)),        # W1
                pl.BlockSpec((H2, H1), lambda i: (0, 0)),        # W2
                pl.BlockSpec((H1, 3), lambda i: (0, 0)),         # [b1 | b2 | w3]
                pl.BlockSpec(memory_space=pltpu.MemorySpace.SMEM),  # b3 scalar
            ],
            out_specs=pl.BlockSpec((1, tb), lambda i: (0, i)),
        ),
        compiler_params=pltpu.CompilerParams(
            dimension_semantics=("parallel",)),
    )(z, w1b, w2b, bias_pack, b3c)

    return out.reshape(bp, 1)[:B]


def init_params(key, fn):
    """Mirror nn.Linear defaults (U[-1/sqrt(fan_in), +]) in PyTorch layout."""
    ks = jax.random.split(key, 6)

    def lin(kw, kb, fan_in, fan_out):
        bound = 1.0 / float(fan_in) ** 0.5
        w = jax.random.uniform(kw, (fan_out, fan_in), jnp.float32, -bound, bound)
        b = jax.random.uniform(kb, (fan_out,), jnp.float32, -bound, bound)
        return w, b

    w1, b1 = lin(ks[0], ks[1], fn, H1)
    w2, b2 = lin(ks[2], ks[3], H1, H2)
    w3, b3 = lin(ks[4], ks[5], H2, 1)
    return w1, b1, w2, b2, w3, b3


def _reference_forward(z, w1, b1, w2, b2, w3, b3):
    """Pure-JAX reference with the same bf16-matmul / f32-accumulate numerics."""
    h = jnp.dot(z.astype(jnp.bfloat16), w1.astype(jnp.bfloat16).T,
                preferred_element_type=jnp.float32) + b1
    h = jnp.where(h > 0, h, NEG_SLOPE * h)
    h = jnp.dot(h.astype(jnp.bfloat16), w2.astype(jnp.bfloat16).T,
                preferred_element_type=jnp.float32) + b2
    h = jnp.where(h > 0, h, NEG_SLOPE * h)
    return jax.nn.sigmoid(h @ w3.T + b3)


if __name__ == "__main__":
    key = jax.random.PRNGKey(0)
    k_z, k_z2, k_p = jax.random.split(key, 3)

    fn = 32
    params = init_params(k_p, fn)

    # Small batch (B << tb: exercises the boundary-block path + slice-back).
    z = jax.random.normal(k_z, (8, fn), jnp.float32)
    out = jax.block_until_ready(discriminator_forward(z, *params))
    ref = _reference_forward(z, *params)
    assert out.shape == (8, 1)
    assert jnp.allclose(out, ref, atol=2e-3, rtol=2e-3)

    # Multi-tile ragged batch (grid > 1 plus a partial last tile).
    z2 = jax.random.normal(k_z2, (300, fn), jnp.float32)
    out2 = jax.block_until_ready(discriminator_forward(z2, *params))
    ref2 = _reference_forward(z2, *params)
    assert out2.shape == (300, 1)
    assert jnp.allclose(out2, ref2, atol=2e-3, rtol=2e-3)

    print("KERNEL_OK")
</pallas_src>

<mosaic_0001>
module attributes {stable_mosaic.version = 11 : i64} {
  func.func @_discriminator_kernel(%arg0: i32, %arg1: memref<256x32xf32, #tpu.memory_space<vmem>>, %arg2: memref<512x32xbf16, #tpu.memory_space<vmem>>, %arg3: memref<256x512xbf16, #tpu.memory_space<vmem>>, %arg4: memref<512x3xf32, #tpu.memory_space<vmem>>, %arg5: memref<1xf32, #tpu.memory_space<smem>>, %arg6: memref<1x256xf32, #tpu.memory_space<vmem>>) attributes {dimension_semantics = [#tpu.dimension_semantics<parallel>], iteration_bounds = array<i64: 1>, scalar_prefetch = 0 : i64, scratch_operands = 0 : i64, tpu.core_type = #tpu.core_type<tc>, window_params = [{transform_indices = @transform_0, window_bounds = array<i64: 256, 32>}, {pipeline_mode = #tpu.pipeline_mode<synchronous>, transform_indices = @transform_1, window_bounds = array<i64: 512, 32>}, {pipeline_mode = #tpu.pipeline_mode<synchronous>, transform_indices = @transform_2, window_bounds = array<i64: 256, 512>}, {pipeline_mode = #tpu.pipeline_mode<synchronous>, transform_indices = @transform_3, window_bounds = array<i64: 512, 3>}, {transform_indices = @transform_4, window_bounds = array<i64: 1>}, {transform_indices = @transform_5, window_bounds = array<i64: 1, 256>}]} {
    %c0 = arith.constant 0 : index
    %c0_0 = arith.constant 0 : index
    %0 = vector.load %arg1[%c0, %c0_0] : memref<256x32xf32, #tpu.memory_space<vmem>>, vector<256x32xf32>
    %1 = arith.truncf %0 : vector<256x32xf32> to vector<256x32xbf16>
    %c0_1 = arith.constant 0 : index
    %c0_2 = arith.constant 0 : index
    %2 = vector.load %arg4[%c0_1, %c0_2] : memref<512x3xf32, #tpu.memory_space<vmem>>, vector<512x1xf32>
    %c0_3 = arith.constant 0 : index
    %c1 = arith.constant 1 : index
    %3 = vector.load %arg4[%c0_3, %c1] : memref<512x3xf32, #tpu.memory_space<vmem>>, vector<256x1xf32>
    %c0_4 = arith.constant 0 : index
    %c2 = arith.constant 2 : index
    %4 = vector.load %arg4[%c0_4, %c2] : memref<512x3xf32, #tpu.memory_space<vmem>>, vector<256x1xf32>
    %c0_5 = arith.constant 0 : index
    %c0_6 = arith.constant 0 : index
    %5 = vector.load %arg2[%c0_5, %c0_6] : memref<512x32xbf16, #tpu.memory_space<vmem>>, vector<512x32xbf16>
    "tpu.trace_start"() <{level = 10 : i32, message = "hf,bf->hb"}> : () -> ()
    %cst = arith.constant dense<0.000000e+00> : vector<512x256xf32>
    %6 = tpu.matmul %5, %1, %cst {dimension_numbers = #tpu.dot_dimension_numbers<[1], [1], [0], [0], [0, 0, 1, 0], [], []>} : vector<512x32xbf16>, vector<256x32xbf16>, vector<512x256xf32> -> vector<512x256xf32>
    "tpu.trace_stop"() : () -> ()
    %7 = vector.broadcast %2 : vector<512x1xf32> to vector<512x256xf32>
    %8 = arith.addf %6, %7 : vector<512x256xf32>
    %cst_7 = arith.constant 0.000000e+00 : f32
    %9 = vector.broadcast %cst_7 : f32 to vector<512x256xf32>
    %10 = arith.cmpf ogt, %8, %9 : vector<512x256xf32>
    %cst_8 = arith.constant 2.000000e-01 : f32
    %11 = vector.broadcast %cst_8 : f32 to vector<512x256xf32>
    %12 = arith.mulf %11, %8 : vector<512x256xf32>
    %13 = arith.select %10, %8, %12 : vector<512x256xi1>, vector<512x256xf32>
    %c0_9 = arith.constant 0 : index
    %c0_10 = arith.constant 0 : index
    %14 = vector.load %arg3[%c0_9, %c0_10] : memref<256x512xbf16, #tpu.memory_space<vmem>>, vector<256x512xbf16>
    %15 = arith.truncf %13 : vector<512x256xf32> to vector<512x256xbf16>
    %cst_11 = arith.constant dense<0.000000e+00> : vector<256x256xf32>
    %16 = tpu.matmul %14, %15, %cst_11 {dimension_numbers = #tpu.dot_dimension_numbers<[1], [0], [0], [1], [0, 0, 1, 1], [], []>} : vector<256x512xbf16>, vector<512x256xbf16>, vector<256x256xf32> -> vector<256x256xf32>
    %17 = vector.broadcast %3 : vector<256x1xf32> to vector<256x256xf32>
    %18 = arith.addf %16, %17 : vector<256x256xf32>
    %cst_12 = arith.constant 0.000000e+00 : f32
    %19 = vector.broadcast %cst_12 : f32 to vector<256x256xf32>
    %20 = arith.cmpf ogt, %18, %19 : vector<256x256xf32>
    %cst_13 = arith.constant 2.000000e-01 : f32
    %21 = vector.broadcast %cst_13 : f32 to vector<256x256xf32>
    %22 = arith.mulf %21, %18 : vector<256x256xf32>
    %23 = arith.select %20, %18, %22 : vector<256x256xi1>, vector<256x256xf32>
    %24 = vector.broadcast %4 : vector<256x1xf32> to vector<256x256xf32>
    %25 = arith.mulf %23, %24 : vector<256x256xf32>
    %cst_14 = arith.constant dense<0.000000e+00> : vector<256xf32>
    %26 = vector.multi_reduction <add>, %25, %cst_14 [0] : vector<256x256xf32> to vector<256xf32>
    %27 = vector.shape_cast %26 : vector<256xf32> to vector<1x256xf32>
    %c0_15 = arith.constant 0 : index
    %28 = memref.load %arg5[%c0_15] : memref<1xf32, #tpu.memory_space<smem>>
    %29 = vector.broadcast %28 : f32 to vector<1x256xf32>
    %30 = arith.addf %27, %29 : vector<1x256xf32>
    %31 = arith.negf %30 : vector<1x256xf32>
    %32 = math.exp %31 : vector<1x256xf32>
    %cst_16 = arith.constant 1.000000e+00 : f32
    %33 = vector.broadcast %cst_16 : f32 to vector<1x256xf32>
    %34 = arith.addf %33, %32 : vector<1x256xf32>
    %35 = arith.divf %33, %34 : vector<1x256xf32>
    %c0_17 = arith.constant 0 : index
    %c0_18 = arith.constant 0 : index
    %36 = vector.load %arg6[%c0_17, %c0_18] : memref<1x256xf32, #tpu.memory_space<vmem>>, vector<1x256xf32>
    tpu.vector_store %arg6[%c0_17, %c0_18], %35 {strides = array<i32>} : memref<1x256xf32, #tpu.memory_space<vmem>>, vector<1x256xf32>,
    return
  }
  func.func @transform_0(%arg0: i32) -> (i32, i32) {
    %c0_i32 = arith.constant 0 : i32
    %c0_i32_0 = arith.constant 0 : i32
    return %arg0, %c0_i32 : i32, i32
  }
  func.func @transform_1(%arg0: i32) -> (i32, i32) {
    %c0_i32 = arith.constant 0 : i32
    %c0_i32_0 = arith.constant 0 : i32
    %c0_i32_1 = arith.constant 0 : i32
    return %c0_i32, %c0_i32_0 : i32, i32
  }
  func.func @transform_2(%arg0: i32) -> (i32, i32) {
    %c0_i32 = arith.constant 0 : i32
    %c0_i32_0 = arith.constant 0 : i32
    %c0_i32_1 = arith.constant 0 : i32
    return %c0_i32, %c0_i32_0 : i32, i32
  }
  func.func @transform_3(%arg0: i32) -> (i32, i32) {
    %c0_i32 = arith.constant 0 : i32
    %c0_i32_0 = arith.constant 0 : i32
    %c0_i32_1 = arith.constant 0 : i32
    return %c0_i32, %c0_i32_0 : i32, i32
  }
  func.func @transform_4(%arg0: i32) -> i32 {
    %c0_i32 = arith.constant 0 : i32
    %c0_i32_0 = arith.constant 0 : i32
    return %c0_i32 : i32
  }
  func.func @transform_5(%arg0: i32) -> (i32, i32) {
    %c0_i32 = arith.constant 0 : i32
    %c0_i32_0 = arith.constant 0 : i32
    return %c0_i32, %arg0 : i32, i32
  }
}

</mosaic_0001>

<llo_original>
// kernel: discriminator_forward.1
$region0: #{discriminator_forward.1}
  #allocation0 [shape = 'u32[]', space=smem, size = 0x4, offset = 0x4, fixed_abs, tag = 'smem constant byte address 0x4 - core index']
  #allocation1 [shape = 'u32[144,128]{1,0:T(1,128)}', space=vmem, size = 0x12000, scoped, tag = 'internal scratch']
  #allocation2 [shape = 'f32[1]{0:T(128)S(6)}', space=smem, size = 0x200, scoped, tag = 'scoped memory for discriminator_forward.1']
  %s0 = inlined_call_operand.vmem [shape: f32[8,32], index: 0, kind: input, shape index: {}]
  %s1 = inlined_call_operand.vmem [shape: bf16[512,32], index: 1, kind: input, shape index: {}]
  %s2 = inlined_call_operand.vmem [shape: bf16[256,512], index: 2, kind: input, shape index: {}]
  %s3 = inlined_call_operand.vmem [shape: f32[512,3], index: 3, kind: input, shape index: {}]
  %s4 = inlined_call_operand.<no memory space> [shape: f32[1], index: 4, kind: input, shape index: {}]
  %s5 = inlined_call_operand.vmem [shape: f32[1,256], index: 5, kind: output, shape index: {}]
  %s6 = sld [smem:[#allocation0]]
  $region30: #{discriminator_forward.1} parent=0
    _
  %s8 = ssub.s32 1, %s6
  %s9 = scalar_select 0, %s8, %s6
  %10 = sst [smem:[#allocation2]] %s4
  // Predicated region
  $region2: #{discriminator_forward.1} parent=0 // pred_check
    _
  $region3: #{discriminator_forward.1} parent=0 // pred_check_branch
    %12 = sbr.rel (0) target = $region5
  $region4: #{discriminator_forward.1} parent=0 // pred_region
    _
  $region5: #{discriminator_forward.1} parent=0 // pred_fallthru
    _
  // Predicated region
  $region6: #{discriminator_forward.1} parent=0 // pred_check
    _
  $region7: #{discriminator_forward.1} parent=0 // pred_check_branch
    %14 = sbr.rel (0) target = $region9
  $region8: #{discriminator_forward.1} parent=0 // pred_region
    _
  $region9: #{discriminator_forward.1} parent=0 // pred_fallthru
    _
  // Predicated region
  $region10: #{discriminator_forward.1} parent=0 // pred_check
    _
  $region11: #{discriminator_forward.1} parent=0 // pred_check_branch
    %16 = sbr.rel (0) target = $region13
  $region12: #{discriminator_forward.1} parent=0 // pred_region
    _
  $region13: #{discriminator_forward.1} parent=0 // pred_fallthru
    _
  // Predicated region
  $region14: #{discriminator_forward.1} parent=0 // pred_check
    _
  $region15: #{discriminator_forward.1} parent=0 // pred_check_branch
    %18 = sbr.rel (0) target = $region17
  $region16: #{discriminator_forward.1} parent=0 // pred_region
    _
  $region17: #{discriminator_forward.1} parent=0 // pred_fallthru
    _
  // Predicated region
  $region18: #{discriminator_forward.1} parent=0 // pred_check
    _
  $region19: #{discriminator_forward.1} parent=0 // pred_check_branch
    %20 = sbr.rel (0) target = $region21
  $region20: #{discriminator_forward.1} parent=0 // pred_region
    _
  $region21: #{discriminator_forward.1} parent=0 // pred_fallthru
    _
  %v22 = vld [vmem:[%s0] sm:$0xff]
  %v23 = vld [vmem:[%s0 + $0x8] sm:$0xff]
  %v24 = vld [vmem:[%s0 + $0x10] sm:$0xff]
  %v25 = vld [vmem:[%s0 + $0x18] sm:$0xff]
  %v26 = vld [vmem:[%s0 + $0x20] sm:$0xff]
  %v27 = vld [vmem:[%s0 + $0x28] sm:$0xff]
  %v28 = vld [vmem:[%s0 + $0x30] sm:$0xff]
  %v29 = vld [vmem:[%s0 + $0x38] sm:$0xff]
  %v30 = vld [vmem:[%s0 + $0x40] sm:$0xff]
  %v31 = vld [vmem:[%s0 + $0x48] sm:$0xff]
  %v32 = vld [vmem:[%s0 + $0x50] sm:$0xff]
  %v33 = vld [vmem:[%s0 + $0x58] sm:$0xff]
  %v34 = vld [vmem:[%s0 + $0x60] sm:$0xff]
  %v35 = vld [vmem:[%s0 + $0x68] sm:$0xff]
  %v36 = vld [vmem:[%s0 + $0x70] sm:$0xff]
  %v37 = vld [vmem:[%s0 + $0x78] sm:$0xff]
  %v38 = vld [vmem:[%s0 + $0x80] sm:$0xff]
  %v39 = vld [vmem:[%s0 + $0x88] sm:$0xff]
  %v40 = vld [vmem:[%s0 + $0x90] sm:$0xff]
  %v41 = vld [vmem:[%s0 + $0x98] sm:$0xff]
  %v42 = vld [vmem:[%s0 + $0xa0] sm:$0xff]
  %v43 = vld [vmem:[%s0 + $0xa8] sm:$0xff]
  %v44 = vld [vmem:[%s0 + $0xb0] sm:$0xff]
  %v45 = vld [vmem:[%s0 + $0xb8] sm:$0xff]
  %v46 = vld [vmem:[%s0 + $0xc0] sm:$0xff]
  %v47 = vld [vmem:[%s0 + $0xc8] sm:$0xff]
  %v48 = vld [vmem:[%s0 + $0xd0] sm:$0xff]
  %v49 = vld [vmem:[%s0 + $0xd8] sm:$0xff]
  %v50 = vld [vmem:[%s0 + $0xe0] sm:$0xff]
  %v51 = vld [vmem:[%s0 + $0xe8] sm:$0xff]
  %v52 = vld [vmem:[%s0 + $0xf0] sm:$0xff]
  %v53 = vld [vmem:[%s0 + $0xf8] sm:$0xff]
  %v54 = vpack.c.bf16 %v23, %v22
  %v55 = vpack.c.bf16 %v25, %v24
  %v56 = vpack.c.bf16 %v27, %v26
  %v57 = vpack.c.bf16 %v29, %v28
  %v58 = vpack.c.bf16 %v31, %v30
  %v59 = vpack.c.bf16 %v33, %v32
  %v60 = vpack.c.bf16 %v35, %v34
  %v61 = vpack.c.bf16 %v37, %v36
  %v62 = vpack.c.bf16 %v39, %v38
  %v63 = vpack.c.bf16 %v41, %v40
  %v64 = vpack.c.bf16 %v43, %v42
  %v65 = vpack.c.bf16 %v45, %v44
  %v66 = vpack.c.bf16 %v47, %v46
  %v67 = vpack.c.bf16 %v49, %v48
  %v68 = vpack.c.bf16 %v51, %v50
  %v69 = vpack.c.bf16 %v53, %v52
  %v70 = vld [vmem:[%s3] sm:$0xff]
  %v71 = vld [vmem:[%s3 + $0x8] sm:$0xff]
  %v72 = vld [vmem:[%s3 + $0x10] sm:$0xff]
  %v73 = vld [vmem:[%s3 + $0x18] sm:$0xff]
  %v74 = vld [vmem:[%s3 + $0x20] sm:$0xff]
  %v75 = vld [vmem:[%s3 + $0x28] sm:$0xff]
  %v76 = vld [vmem:[%s3 + $0x30] sm:$0xff]
  %v77 = vld [vmem:[%s3 + $0x38] sm:$0xff]
  %v78 = vld [vmem:[%s3 + $0x40] sm:$0xff]
  %v79 = vld [vmem:[%s3 + $0x48] sm:$0xff]
  %v80 = vld [vmem:[%s3 + $0x50] sm:$0xff]
  %v81 = vld [vmem:[%s3 + $0x58] sm:$0xff]
  %v82 = vld [vmem:[%s3 + $0x60] sm:$0xff]
  %v83 = vld [vmem:[%s3 + $0x68] sm:$0xff]
  %v84 = vld [vmem:[%s3 + $0x70] sm:$0xff]
  %v85 = vld [vmem:[%s3 + $0x78] sm:$0xff]
  %v86 = vld [vmem:[%s3 + $0x80] sm:$0xff]
  %v87 = vld [vmem:[%s3 + $0x88] sm:$0xff]
  %v88 = vld [vmem:[%s3 + $0x90] sm:$0xff]
  %v89 = vld [vmem:[%s3 + $0x98] sm:$0xff]
  %v90 = vld [vmem:[%s3 + $0xa0] sm:$0xff]
  %v91 = vld [vmem:[%s3 + $0xa8] sm:$0xff]
  %v92 = vld [vmem:[%s3 + $0xb0] sm:$0xff]
  %v93 = vld [vmem:[%s3 + $0xb8] sm:$0xff]
  %v94 = vld [vmem:[%s3 + $0xc0] sm:$0xff]
  %v95 = vld [vmem:[%s3 + $0xc8] sm:$0xff]
  %v96 = vld [vmem:[%s3 + $0xd0] sm:$0xff]
  %v97 = vld [vmem:[%s3 + $0xd8] sm:$0xff]
  %v98 = vld [vmem:[%s3 + $0xe0] sm:$0xff]
  %v99 = vld [vmem:[%s3 + $0xe8] sm:$0xff]
  %v100 = vld [vmem:[%s3 + $0xf0] sm:$0xff]
  %v101 = vld [vmem:[%s3 + $0xf8] sm:$0xff]
  %v102 = vld [vmem:[%s3 + $0x100] sm:$0xff]
  %v103 = vld [vmem:[%s3 + $0x108] sm:$0xff]
  %v104 = vld [vmem:[%s3 + $0x110] sm:$0xff]
  %v105 = vld [vmem:[%s3 + $0x118] sm:$0xff]
  %v106 = vld [vmem:[%s3 + $0x120] sm:$0xff]
  %v107 = vld [vmem:[%s3 + $0x128] sm:$0xff]
  %v108 = vld [vmem:[%s3 + $0x130] sm:$0xff]
  %v109 = vld [vmem:[%s3 + $0x138] sm:$0xff]
  %v110 = vld [vmem:[%s3 + $0x140] sm:$0xff]
  %v111 = vld [vmem:[%s3 + $0x148] sm:$0xff]
  %v112 = vld [vmem:[%s3 + $0x150] sm:$0xff]
  %v113 = vld [vmem:[%s3 + $0x158] sm:$0xff]
  %v114 = vld [vmem:[%s3 + $0x160] sm:$0xff]
  %v115 = vld [vmem:[%s3 + $0x168] sm:$0xff]
  %v116 = vld [vmem:[%s3 + $0x170] sm:$0xff]
  %v117 = vld [vmem:[%s3 + $0x178] sm:$0xff]
  %v118 = vld [vmem:[%s3 + $0x180] sm:$0xff]
  %v119 = vld [vmem:[%s3 + $0x188] sm:$0xff]
  %v120 = vld [vmem:[%s3 + $0x190] sm:$0xff]
  %v121 = vld [vmem:[%s3 + $0x198] sm:$0xff]
  %v122 = vld [vmem:[%s3 + $0x1a0] sm:$0xff]
  %v123 = vld [vmem:[%s3 + $0x1a8] sm:$0xff]
  %v124 = vld [vmem:[%s3 + $0x1b0] sm:$0xff]
  %v125 = vld [vmem:[%s3 + $0x1b8] sm:$0xff]
  %v126 = vld [vmem:[%s3 + $0x1c0] sm:$0xff]
  %v127 = vld [vmem:[%s3 + $0x1c8] sm:$0xff]
  %v128 = vld [vmem:[%s3 + $0x1d0] sm:$0xff]
  %v129 = vld [vmem:[%s3 + $0x1d8] sm:$0xff]
  %v130 = vld [vmem:[%s3 + $0x1e0] sm:$0xff]
  %v131 = vld [vmem:[%s3 + $0x1e8] sm:$0xff]
  %v132 = vld [vmem:[%s3 + $0x1f0] sm:$0xff]
  %v133 = vld [vmem:[%s3 + $0x1f8] sm:$0xff]
  %v134 = vld [vmem:[%s1] sm:$0xf]
  %v135 = vld [vmem:[%s1 + $0x4] sm:$0xf]
  %v136 = vld [vmem:[%s1 + $0x8] sm:$0xf]
  %v137 = vld [vmem:[%s1 + $0xc] sm:$0xf]
  %v138 = vld [vmem:[%s1 + $0x10] sm:$0xf]
  %v139 = vld [vmem:[%s1 + $0x14] sm:$0xf]
  %v140 = vld [vmem:[%s1 + $0x18] sm:$0xf]
  %v141 = vld [vmem:[%s1 + $0x1c] sm:$0xf]
  %v142 = vld [vmem:[%s1 + $0x20] sm:$0xf]
  %v143 = vld [vmem:[%s1 + $0x24] sm:$0xf]
  %v144 = vld [vmem:[%s1 + $0x28] sm:$0xf]
  %v145 = vld [vmem:[%s1 + $0x2c] sm:$0xf]
  %v146 = vld [vmem:[%s1 + $0x30] sm:$0xf]
  %v147 = vld [vmem:[%s1 + $0x34] sm:$0xf]
  %v148 = vld [vmem:[%s1 + $0x38] sm:$0xf]
  %v149 = vld [vmem:[%s1 + $0x3c] sm:$0xf]
  %v150 = vld [vmem:[%s1 + $0x40] sm:$0xf]
  %v151 = vld [vmem:[%s1 + $0x44] sm:$0xf]
  %v152 = vld [vmem:[%s1 + $0x48] sm:$0xf]
  %v153 = vld [vmem:[%s1 + $0x4c] sm:$0xf]
  %v154 = vld [vmem:[%s1 + $0x50] sm:$0xf]
  %v155 = vld [vmem:[%s1 + $0x54] sm:$0xf]
  %v156 = vld [vmem:[%s1 + $0x58] sm:$0xf]
  %v157 = vld [vmem:[%s1 + $0x5c] sm:$0xf]
  %v158 = vld [vmem:[%s1 + $0x60] sm:$0xf]
  %v159 = vld [vmem:[%s1 + $0x64] sm:$0xf]
  %v160 = vld [vmem:[%s1 + $0x68] sm:$0xf]
  %v161 = vld [vmem:[%s1 + $0x6c] sm:$0xf]
  %v162 = vld [vmem:[%s1 + $0x70] sm:$0xf]
  %v163 = vld [vmem:[%s1 + $0x74] sm:$0xf]
  %v164 = vld [vmem:[%s1 + $0x78] sm:$0xf]
  %v165 = vld [vmem:[%s1 + $0x7c] sm:$0xf]
  %v166 = vld [vmem:[%s1 + $0x80] sm:$0xf]
  %v167 = vld [vmem:[%s1 + $0x84] sm:$0xf]
  %v168 = vld [vmem:[%s1 + $0x88] sm:$0xf]
  %v169 = vld [vmem:[%s1 + $0x8c] sm:$0xf]
  %v170 = vld [vmem:[%s1 + $0x90] sm:$0xf]
  %v171 = vld [vmem:[%s1 + $0x94] sm:$0xf]
  %v172 = vld [vmem:[%s1 + $0x98] sm:$0xf]
  %v173 = vld [vmem:[%s1 + $0x9c] sm:$0xf]
  %v174 = vld [vmem:[%s1 + $0xa0] sm:$0xf]
  %v175 = vld [vmem:[%s1 + $0xa4] sm:$0xf]
  %v176 = vld [vmem:[%s1 + $0xa8] sm:$0xf]
  %v177 = vld [vmem:[%s1 + $0xac] sm:$0xf]
  %v178 = vld [vmem:[%s1 + $0xb0] sm:$0xf]
  %v179 = vld [vmem:[%s1 + $0xb4] sm:$0xf]
  %v180 = vld [vmem:[%s1 + $0xb8] sm:$0xf]
  %v181 = vld [vmem:[%s1 + $0xbc] sm:$0xf]
  %v182 = vld [vmem:[%s1 + $0xc0] sm:$0xf]
  %v183 = vld [vmem:[%s1 + $0xc4] sm:$0xf]
  %v184 = vld [vmem:[%s1 + $0xc8] sm:$0xf]
  %v185 = vld [vmem:[%s1 + $0xcc] sm:$0xf]
  %v186 = vld [vmem:[%s1 + $0xd0] sm:$0xf]
  %v187 = vld [vmem:[%s1 + $0xd4] sm:$0xf]
  %v188 = vld [vmem:[%s1 + $0xd8] sm:$0xf]
  %v189 = vld [vmem:[%s1 + $0xdc] sm:$0xf]
  %v190 = vld [vmem:[%s1 + $0xe0] sm:$0xf]
  %v191 = vld [vmem:[%s1 + $0xe4] sm:$0xf]
  %v192 = vld [vmem:[%s1 + $0xe8] sm:$0xf]
  %v193 = vld [vmem:[%s1 + $0xec] sm:$0xf]
  %v194 = vld [vmem:[%s1 + $0xf0] sm:$0xf]
  %v195 = vld [vmem:[%s1 + $0xf4] sm:$0xf]
  %v196 = vld [vmem:[%s1 + $0xf8] sm:$0xf]
  %v197 = vld [vmem:[%s1 + $0xfc] sm:$0xf]
  %199 = vset.pattern.permute.xlu0 0
  %200 = vperm.xlu0 %199, %v70
  %v201 = vpop.permute.xlu0 %200
  %204 = vset.pattern.permute.xlu0 0
  %205 = vperm.xlu0 %204, %v71
  %v206 = vpop.permute.xlu0 %205
  %209 = vset.pattern.permute.xlu0 0
  %210 = vperm.xlu0 %209, %v72
  %v211 = vpop.permute.xlu0 %210
  %214 = vset.pattern.permute.xlu0 0
  %215 = vperm.xlu0 %214, %v73
  %v216 = vpop.permute.xlu0 %215
  %219 = vset.pattern.permute.xlu0 0
  %220 = vperm.xlu0 %219, %v74
  %v221 = vpop.permute.xlu0 %220
  %224 = vset.pattern.permute.xlu0 0
  %225 = vperm.xlu0 %224, %v75
  %v226 = vpop.permute.xlu0 %225
  %229 = vset.pattern.permute.xlu0 0
  %230 = vperm.xlu0 %229, %v76
  %v231 = vpop.permute.xlu0 %230
  %234 = vset.pattern.permute.xlu0 0
  %235 = vperm.xlu0 %234, %v77
  %v236 = vpop.permute.xlu0 %235
  %239 = vset.pattern.permute.xlu0 0
  %240 = vperm.xlu0 %239, %v78
  %v241 = vpop.permute.xlu0 %240
  %244 = vset.pattern.permute.xlu0 0
  %245 = vperm.xlu0 %244, %v79
  %v246 = vpop.permute.xlu0 %245
  %249 = vset.pattern.permute.xlu0 0
  %250 = vperm.xlu0 %249, %v80
  %v251 = vpop.permute.xlu0 %250
  %254 = vset.pattern.permute.xlu0 0
  %255 = vperm.xlu0 %254, %v81
  %v256 = vpop.permute.xlu0 %255
  %259 = vset.pattern.permute.xlu0 0
  %260 = vperm.xlu0 %259, %v82
  %v261 = vpop.permute.xlu0 %260
  %264 = vset.pattern.permute.xlu0 0
  %265 = vperm.xlu0 %264, %v83
  %v266 = vpop.permute.xlu0 %265
  %269 = vset.pattern.permute.xlu0 0
  %270 = vperm.xlu0 %269, %v84
  %v271 = vpop.permute.xlu0 %270
  %274 = vset.pattern.permute.xlu0 0
  %275 = vperm.xlu0 %274, %v85
  %v276 = vpop.permute.xlu0 %275
  %279 = vset.pattern.permute.xlu0 0
  %280 = vperm.xlu0 %279, %v86
  %v281 = vpop.permute.xlu0 %280
  %284 = vset.pattern.permute.xlu0 0
  %285 = vperm.xlu0 %284, %v87
  %v286 = vpop.permute.xlu0 %285
  %289 = vset.pattern.permute.xlu0 0
  %290 = vperm.xlu0 %289, %v88
  %v291 = vpop.permute.xlu0 %290
  %294 = vset.pattern.permute.xlu0 0
  %295 = vperm.xlu0 %294, %v89
  %v296 = vpop.permute.xlu0 %295
  %299 = vset.pattern.permute.xlu0 0
  %300 = vperm.xlu0 %299, %v90
  %v301 = vpop.permute.xlu0 %300
  %304 = vset.pattern.permute.xlu0 0
  %305 = vperm.xlu0 %304, %v91
  %v306 = vpop.permute.xlu0 %305
  %309 = vset.pattern.permute.xlu0 0
  %310 = vperm.xlu0 %309, %v92
  %v311 = vpop.permute.xlu0 %310
  %314 = vset.pattern.permute.xlu0 0
  %315 = vperm.xlu0 %314, %v93
  %v316 = vpop.permute.xlu0 %315
  %319 = vset.pattern.permute.xlu0 0
  %320 = vperm.xlu0 %319, %v94
  %v321 = vpop.permute.xlu0 %320
  %324 = vset.pattern.permute.xlu0 0
  %325 = vperm.xlu0 %324, %v95
  %v326 = vpop.permute.xlu0 %325
  %329 = vset.pattern.permute.xlu0 0
  %330 = vperm.xlu0 %329, %v96
  %v331 = vpop.permute.xlu0 %330
  %334 = vset.pattern.permute.xlu0 0
  %335 = vperm.xlu0 %334, %v97
  %v336 = vpop.permute.xlu0 %335
  %339 = vset.pattern.permute.xlu0 0
  %340 = vperm.xlu0 %339, %v98
  %v341 = vpop.permute.xlu0 %340
  %344 = vset.pattern.permute.xlu0 0
  %345 = vperm.xlu0 %344, %v99
  %v346 = vpop.permute.xlu0 %345
  %349 = vset.pattern.permute.xlu0 0
  %350 = vperm.xlu0 %349, %v100
  %v351 = vpop.permute.xlu0 %350
  %354 = vset.pattern.permute.xlu0 0
  %355 = vperm.xlu0 %354, %v101
  %v356 = vpop.permute.xlu0 %355
  %359 = vset.pattern.permute.xlu0 0
  %360 = vperm.xlu0 %359, %v102
  %v361 = vpop.permute.xlu0 %360
  %364 = vset.pattern.permute.xlu0 0
  %365 = vperm.xlu0 %364, %v103
  %v366 = vpop.permute.xlu0 %365
  %369 = vset.pattern.permute.xlu0 0
  %370 = vperm.xlu0 %369, %v104
  %v371 = vpop.permute.xlu0 %370
  %374 = vset.pattern.permute.xlu0 0
  %375 = vperm.xlu0 %374, %v105
  %v376 = vpop.permute.xlu0 %375
  %379 = vset.pattern.permute.xlu0 0
  %380 = vperm.xlu0 %379, %v106
  %v381 = vpop.permute.xlu0 %380
  %384 = vset.pattern.permute.xlu0 0
  %385 = vperm.xlu0 %384, %v107
  %v386 = vpop.permute.xlu0 %385
  %389 = vset.pattern.permute.xlu0 0
  %390 = vperm.xlu0 %389, %v108
  %v391 = vpop.permute.xlu0 %390
  %394 = vset.pattern.permute.xlu0 0
  %395 = vperm.xlu0 %394, %v109
  %v396 = vpop.permute.xlu0 %395
  %399 = vset.pattern.permute.xlu0 0
  %400 = vperm.xlu0 %399, %v110
  %v401 = vpop.permute.xlu0 %400
  %404 = vset.pattern.permute.xlu0 0
  %405 = vperm.xlu0 %404, %v111
  %v406 = vpop.permute.xlu0 %405
  %409 = vset.pattern.permute.xlu0 0
  %410 = vperm.xlu0 %409, %v112
  %v411 = vpop.permute.xlu0 %410
  %414 = vset.pattern.permute.xlu0 0
  %415 = vperm.xlu0 %414, %v113
  %v416 = vpop.permute.xlu0 %415
  %419 = vset.pattern.permute.xlu0 0
  %420 = vperm.xlu0 %419, %v114
  %v421 = vpop.permute.xlu0 %420
  %424 = vset.pattern.permute.xlu0 0
  %425 = vperm.xlu0 %424, %v115
  %v426 = vpop.permute.xlu0 %425
  %429 = vset.pattern.permute.xlu0 0
  %430 = vperm.xlu0 %429, %v116
  %v431 = vpop.permute.xlu0 %430
  %434 = vset.pattern.permute.xlu0 0
  %435 = vperm.xlu0 %434, %v117
  %v436 = vpop.permute.xlu0 %435
  %439 = vset.pattern.permute.xlu0 0
  %440 = vperm.xlu0 %439, %v118
  %v441 = vpop.permute.xlu0 %440
  %444 = vset.pattern.permute.xlu0 0
  %445 = vperm.xlu0 %444, %v119
  %v446 = vpop.permute.xlu0 %445
  %449 = vset.pattern.permute.xlu0 0
  %450 = vperm.xlu0 %449, %v120
  %v451 = vpop.permute.xlu0 %450
  %454 = vset.pattern.permute.xlu0 0
  %455 = vperm.xlu0 %454, %v121
  %v456 = vpop.permute.xlu0 %455
  %459 = vset.pattern.permute.xlu0 0
  %460 = vperm.xlu0 %459, %v122
  %v461 = vpop.permute.xlu0 %460
  %464 = vset.pattern.permute.xlu0 0
  %465 = vperm.xlu0 %464, %v123
  %v466 = vpop.permute.xlu0 %465
  %469 = vset.pattern.permute.xlu0 0
  %470 = vperm.xlu0 %469, %v124
  %v471 = vpop.permute.xlu0 %470
  %474 = vset.pattern.permute.xlu0 0
  %475 = vperm.xlu0 %474, %v125
  %v476 = vpop.permute.xlu0 %475
  %479 = vset.pattern.permute.xlu0 0
  %480 = vperm.xlu0 %479, %v126
  %v481 = vpop.permute.xlu0 %480
  %484 = vset.pattern.permute.xlu0 0
  %485 = vperm.xlu0 %484, %v127
  %v486 = vpop.permute.xlu0 %485
  %489 = vset.pattern.permute.xlu0 0
  %490 = vperm.xlu0 %489, %v128
  %v491 = vpop.permute.xlu0 %490
  %494 = vset.pattern.permute.xlu0 0
  %495 = vperm.xlu0 %494, %v129
  %v496 = vpop.permute.xlu0 %495
  %499 = vset.pattern.permute.xlu0 0
  %500 = vperm.xlu0 %499, %v130
  %v501 = vpop.permute.xlu0 %500
  %504 = vset.pattern.permute.xlu0 0
  %505 = vperm.xlu0 %504, %v131
  %v506 = vpop.permute.xlu0 %505
  %509 = vset.pattern.permute.xlu0 0
  %510 = vperm.xlu0 %509, %v132
  %v511 = vpop.permute.xlu0 %510
  %514 = vset.pattern.permute.xlu0 0
  %515 = vperm.xlu0 %514, %v133
  %v516 = vpop.permute.xlu0 %515
  %v582 = vunpack.c.l.b16 %v134
  %v583 = vunpack.c.l.b16 %v135
  %v584 = vunpack.c.l.b16 %v136
  %v585 = vunpack.c.l.b16 %v137
  %v586 = vunpack.c.l.b16 %v138
  %v587 = vunpack.c.l.b16 %v139
  %v588 = vunpack.c.l.b16 %v140
  %v589 = vunpack.c.l.b16 %v141
  %v590 = vunpack.c.l.b16 %v142
  %v591 = vunpack.c.l.b16 %v143
  %v592 = vunpack.c.l.b16 %v144
  %v593 = vunpack.c.l.b16 %v145
  %v594 = vunpack.c.l.b16 %v146
  %v595 = vunpack.c.l.b16 %v147
  %v596 = vunpack.c.l.b16 %v148
  %v597 = vunpack.c.l.b16 %v149
  %v598 = vunpack.c.l.b16 %v150
  %v599 = vunpack.c.l.b16 %v151
  %v600 = vunpack.c.l.b16 %v152
  %v601 = vunpack.c.l.b16 %v153
  %v602 = vunpack.c.l.b16 %v154
  %v603 = vunpack.c.l.b16 %v155
  %v604 = vunpack.c.l.b16 %v156
  %v605 = vunpack.c.l.b16 %v157
  %v606 = vunpack.c.l.b16 %v158
  %v607 = vunpack.c.l.b16 %v159
  %v608 = vunpack.c.l.b16 %v160
  %v609 = vunpack.c.l.b16 %v161
  %v610 = vunpack.c.l.b16 %v162
  %v611 = vunpack.c.l.b16 %v163
  %v612 = vunpack.c.l.b16 %v164
  %v613 = vunpack.c.l.b16 %v165
  %v614 = vunpack.c.l.b16 %v166
  %v615 = vunpack.c.l.b16 %v167
  %v616 = vunpack.c.l.b16 %v168
  %v617 = vunpack.c.l.b16 %v169
  %v618 = vunpack.c.l.b16 %v170
  %v619 = vunpack.c.l.b16 %v171
  %v620 = vunpack.c.l.b16 %v172
  %v621 = vunpack.c.l.b16 %v173
  %v622 = vunpack.c.l.b16 %v174
  %v623 = vunpack.c.l.b16 %v175
  %v624 = vunpack.c.l.b16 %v176
  %v625 = vunpack.c.l.b16 %v177
  %v626 = vunpack.c.l.b16 %v178
  %v627 = vunpack.c.l.b16 %v179
  %v628 = vunpack.c.l.b16 %v180
  %v629 = vunpack.c.l.b16 %v181
  %v630 = vunpack.c.l.b16 %v182
  %v631 = vunpack.c.l.b16 %v183
  %v632 = vunpack.c.l.b16 %v184
  %v633 = vunpack.c.l.b16 %v185
  %v634 = vunpack.c.l.b16 %v186
  %v635 = vunpack.c.l.b16 %v187
  %v636 = vunpack.c.l.b16 %v188
  %v637 = vunpack.c.l.b16 %v189
  %v638 = vunpack.c.l.b16 %v190
  %v639 = vunpack.c.l.b16 %v191
  %v640 = vunpack.c.l.b16 %v192
  %v641 = vunpack.c.l.b16 %v193
  %v642 = vunpack.c.l.b16 %v194
  %v643 = vunpack.c.l.b16 %v195
  %v644 = vunpack.c.l.b16 %v196
  %v645 = vunpack.c.l.b16 %v197
  %v646 = vpack.c.b16 %v583, %v582
  %v647 = vpack.c.b16 %v585, %v584
  %v648 = vpack.c.b16 %v587, %v586
  %v649 = vpack.c.b16 %v589, %v588
  %v650 = vpack.c.b16 %v591, %v590
  %v651 = vpack.c.b16 %v593, %v592
  %v652 = vpack.c.b16 %v595, %v594
  %v653 = vpack.c.b16 %v597, %v596
  %v654 = vpack.c.b16 %v599, %v598
  %v655 = vpack.c.b16 %v601, %v600
  %v656 = vpack.c.b16 %v603, %v602
  %v657 = vpack.c.b16 %v605, %v604
  %v658 = vpack.c.b16 %v607, %v606
  %v659 = vpack.c.b16 %v609, %v608
  %v660 = vpack.c.b16 %v611, %v610
  %v661 = vpack.c.b16 %v613, %v612
  %v662 = vpack.c.b16 %v615, %v614
  %v663 = vpack.c.b16 %v617, %v616
  %v664 = vpack.c.b16 %v619, %v618
  %v665 = vpack.c.b16 %v621, %v620
  %v666 = vpack.c.b16 %v623, %v622
  %v667 = vpack.c.b16 %v625, %v624
  %v668 = vpack.c.b16 %v627, %v626
  %v669 = vpack.c.b16 %v629, %v628
  %v670 = vpack.c.b16 %v631, %v630
  %v671 = vpack.c.b16 %v633, %v632
  %v672 = vpack.c.b16 %v635, %v634
  %v673 = vpack.c.b16 %v637, %v636
  %v674 = vpack.c.b16 %v639, %v638
  %v675 = vpack.c.b16 %v641, %v640
  %v676 = vpack.c.b16 %v643, %v642
  %v677 = vpack.c.b16 %v645, %v644
  %vm678 = vcmask 261120
  %v680 = vsel %vm678, %v646, 0
  %v683 = vsel %vm678, %v647, 0
  %v686 = vsel %vm678, %v648, 0
  %v689 = vsel %vm678, %v649, 0
  %v692 = vsel %vm678, %v650, 0
  %v695 = vsel %vm678, %v651, 0
  %v698 = vsel %vm678, %v652, 0
  %v701 = vsel %vm678, %v653, 0
  %v704 = vsel %vm678, %v654, 0
  %v707 = vsel %vm678, %v655, 0
  %v710 = vsel %vm678, %v656, 0
  %v713 = vsel %vm678, %v657, 0
  %v716 = vsel %vm678, %v658, 0
  %v719 = vsel %vm678, %v659, 0
  %v722 = vsel %vm678, %v660, 0
  %v725 = vsel %vm678, %v661, 0
  %v728 = vsel %vm678, %v662, 0
  %v731 = vsel %vm678, %v663, 0
  %v734 = vsel %vm678, %v664, 0
  %v737 = vsel %vm678, %v665, 0
  %v740 = vsel %vm678, %v666, 0
  %v743 = vsel %vm678, %v667, 0
  %v746 = vsel %vm678, %v668, 0
  %v749 = vsel %vm678, %v669, 0
  %v752 = vsel %vm678, %v670, 0
  %v755 = vsel %vm678, %v671, 0
  %v758 = vsel %vm678, %v672, 0
  %v761 = vsel %vm678, %v673, 0
  %v764 = vsel %vm678, %v674, 0
  %v767 = vsel %vm678, %v675, 0
  %v770 = vsel %vm678, %v676, 0
  %v773 = vsel %vm678, %v677, 0
  %v776 = vsel %vm678, %v54, 0
  %v779 = vsel %vm678, %v55, 0
  %v782 = vsel %vm678, %v56, 0
  %v785 = vsel %vm678, %v57, 0
  %v788 = vsel %vm678, %v58, 0
  %v791 = vsel %vm678, %v59, 0
  %v794 = vsel %vm678, %v60, 0
  %v797 = vsel %vm678, %v61, 0
  %v800 = vsel %vm678, %v62, 0
  %v803 = vsel %vm678, %v63, 0
  %v806 = vsel %vm678, %v64, 0
  %v809 = vsel %vm678, %v65, 0
  %v812 = vsel %vm678, %v66, 0
  %v815 = vsel %vm678, %v67, 0
  %v818 = vsel %vm678, %v68, 0
  %v821 = vsel %vm678, %v69, 0
  %823 = vmatprep.subr.bf16.mxu0 0
  %824 = vmatpush1.bf16.xpose.msra.mxu0 %v776
  %825 = vmatprep.subr.bf16.mxu0 0
  %826 = vmatpush1.bf16.xpose.msra.mxu0 %v779
  %827 = vmatprep.subr.bf16.mxu0 0
  %828 = vmatpush1.bf16.xpose.msra.mxu0 %v782
  %829 = vmatprep.subr.bf16.mxu0 0
  %830 = vmatpush1.bf16.xpose.msra.mxu0 %v785
  %831 = vmatprep.subr.bf16.mxu0 0
  %832 = vmatpush1.bf16.xpose.msra.mxu0 %v788
  %833 = vmatprep.subr.bf16.mxu0 0
  %834 = vmatpush1.bf16.xpose.msra.mxu0 %v791
  %835 = vmatprep.subr.bf16.mxu0 0
  %836 = vmatpush1.bf16.xpose.msra.mxu0 %v794
  %837 = vmatprep.subr.bf16.mxu0 0
  %838 = vmatpush1.bf16.xpose.msra.mxu0 %v797
  %839 = vmatprep.subr.bf16.mxu0 0
  %840 = vmatpush1.bf16.xpose.msra.mxu0 %v800
  %841 = vmatprep.subr.bf16.mxu0 0
  %842 = vmatpush1.bf16.xpose.msra.mxu0 %v803
  %843 = vmatprep.subr.bf16.mxu0 0
  %844 = vmatpush1.bf16.xpose.msra.mxu0 %v806
  %845 = vmatprep.subr.bf16.mxu0 0
  %846 = vmatpush1.bf16.xpose.msra.mxu0 %v809
  %847 = vmatprep.subr.bf16.mxu0 0
  %848 = vmatpush1.bf16.xpose.msra.mxu0 %v812
  %849 = vmatprep.subr.bf16.mxu0 0
  %850 = vmatpush1.bf16.xpose.msra.mxu0 %v815
  %851 = vmatprep.subr.bf16.mxu0 0
  %852 = vmatpush1.bf16.xpose.msra.mxu0 %v818
  %853 = vmatprep.subr.bf16.mxu0 0
  %854 = vmatpush1.bf16.xpose.msra.mxu0 %v821
  %855 = vmatprep.mubr.bf16.mxu0 0
  %856 = vmatmul.mubr.bf16.gmra.mrb[0].mxu0 %v680
  %v857 = vpop.f32.mrb[0].mxu0
  %v858 = vadd.f32 %v201, %v857
  %v859 = vpop.f32.mrb[0].mxu0
  %v860 = vadd.f32 %v201, %v859
  %v861 = vpop.f32.mrb[0].mxu0
  %v862 = vadd.f32 %v206, %v861
  %v863 = vpop.f32.mrb[0].mxu0
  %v864 = vadd.f32 %v206, %v863
  %865 = vmatprep.mubr.bf16.mxu0 0
  %866 = vmatmul.mubr.bf16.gmra.mrb[0].mxu0 %v683
  %v867 = vpop.f32.mrb[0].mxu0
  %v868 = vadd.f32 %v211, %v867
  %v869 = vpop.f32.mrb[0].mxu0
  %v870 = vadd.f32 %v211, %v869
  %v871 = vpop.f32.mrb[0].mxu0
  %v872 = vadd.f32 %v216, %v871
  %v873 = vpop.f32.mrb[0].mxu0
  %v874 = vadd.f32 %v216, %v873
  %875 = vmatprep.mubr.bf16.mxu0 0
  %876 = vmatmul.mubr.bf16.gmra.mrb[0].mxu0 %v686
  %v877 = vpop.f32.mrb[0].mxu0
  %v878 = vadd.f32 %v221, %v877
  %v879 = vpop.f32.mrb[0].mxu0
  %v880 = vadd.f32 %v221, %v879
  %v881 = vpop.f32.mrb[0].mxu0
  %v882 = vadd.f32 %v226, %v881
  %v883 = vpop.f32.mrb[0].mxu0
  %v884 = vadd.f32 %v226, %v883
  %885 = vmatprep.mubr.bf16.mxu0 0
  %886 = vmatmul.mubr.bf16.gmra.mrb[0].mxu0 %v689
  %v887 = vpop.f32.mrb[0].mxu0
  %v888 = vadd.f32 %v231, %v887
  %v889 = vpop.f32.mrb[0].mxu0
  %v890 = vadd.f32 %v231, %v889
  %v891 = vpop.f32.mrb[0].mxu0
  %v892 = vadd.f32 %v236, %v891
  %v893 = vpop.f32.mrb[0].mxu0
  %v894 = vadd.f32 %v236, %v893
  %895 = vmatprep.mubr.bf16.mxu0 0
  %896 = vmatmul.mubr.bf16.gmra.mrb[0].mxu0 %v692
  %v897 = vpop.f32.mrb[0].mxu0
  %v898 = vadd.f32 %v241, %v897
  %v899 = vpop.f32.mrb[0].mxu0
  %v900 = vadd.f32 %v241, %v899
  %v901 = vpop.f32.mrb[0].mxu0
  %v902 = vadd.f32 %v246, %v901
  %v903 = vpop.f32.mrb[0].mxu0
  %v904 = vadd.f32 %v246, %v903
  %905 = vmatprep.mubr.bf16.mxu0 0
  %906 = vmatmul.mubr.bf16.gmra.mrb[0].mxu0 %v695
  %v907 = vpop.f32.mrb[0].mxu0
  %v908 = vadd.f32 %v251, %v907
  %v909 = vpop.f32.mrb[0].mxu0
  %v910 = vadd.f32 %v251, %v909
  %v911 = vpop.f32.mrb[0].mxu0
  %v912 = vadd.f32 %v256, %v911
  %v913 = vpop.f32.mrb[0].mxu0
  %v914 = vadd.f32 %v256, %v913
  %915 = vmatprep.mubr.bf16.mxu0 0
  %916 = vmatmul.mubr.bf16.gmra.mrb[0].mxu0 %v698
  %v917 = vpop.f32.mrb[0].mxu0
  %v918 = vadd.f32 %v261, %v917
  %v919 = vpop.f32.mrb[0].mxu0
  %v920 = vadd.f32 %v261, %v919
  %v921 = vpop.f32.mrb[0].mxu0
  %v922 = vadd.f32 %v266, %v921
  %v923 = vpop.f32.mrb[0].mxu0
  %v924 = vadd.f32 %v266, %v923
  %925 = vmatprep.mubr.bf16.mxu0 0
  %926 = vmatmul.mubr.bf16.gmra.mrb[0].mxu0 %v701
  %v927 = vpop.f32.mrb[0].mxu0
  %v928 = vadd.f32 %v271, %v927
  %v929 = vpop.f32.mrb[0].mxu0
  %v930 = vadd.f32 %v271, %v929
  %v931 = vpop.f32.mrb[0].mxu0
  %v932 = vadd.f32 %v276, %v931
  %v933 = vpop.f32.mrb[0].mxu0
  %v934 = vadd.f32 %v276, %v933
  %935 = vmatprep.mubr.bf16.mxu0 0
  %936 = vmatmul.mubr.bf16.gmra.mrb[0].mxu0 %v704
  %v937 = vpop.f32.mrb[0].mxu0
  %v938 = vadd.f32 %v281, %v937
  %v939 = vpop.f32.mrb[0].mxu0
  %v940 = vadd.f32 %v281, %v939
  %v941 = vpop.f32.mrb[0].mxu0
  %v942 = vadd.f32 %v286, %v941
  %v943 = vpop.f32.mrb[0].mxu0
  %v944 = vadd.f32 %v286, %v943
  %945 = vmatprep.mubr.bf16.mxu0 0
  %946 = vmatmul.mubr.bf16.gmra.mrb[0].mxu0 %v707
  %v947 = vpop.f32.mrb[0].mxu0
  %v948 = vadd.f32 %v291, %v947
  %v949 = vpop.f32.mrb[0].mxu0
  %v950 = vadd.f32 %v291, %v949
  %v951 = vpop.f32.mrb[0].mxu0
  %v952 = vadd.f32 %v296, %v951
  %v953 = vpop.f32.mrb[0].mxu0
  %v954 = vadd.f32 %v296, %v953
  %955 = vmatprep.mubr.bf16.mxu0 0
  %956 = vmatmul.mubr.bf16.gmra.mrb[0].mxu0 %v710
  %v957 = vpop.f32.mrb[0].mxu0
  %v958 = vadd.f32 %v301, %v957
  %v959 = vpop.f32.mrb[0].mxu0
  %v960 = vadd.f32 %v301, %v959
  %v961 = vpop.f32.mrb[0].mxu0
  %v962 = vadd.f32 %v306, %v961
  %v963 = vpop.f32.mrb[0].mxu0
  %v964 = vadd.f32 %v306, %v963
  %965 = vmatprep.mubr.bf16.mxu0 0
  %966 = vmatmul.mubr.bf16.gmra.mrb[0].mxu0 %v713
  %v967 = vpop.f32.mrb[0].mxu0
  %v968 = vadd.f32 %v311, %v967
  %v969 = vpop.f32.mrb[0].mxu0
  %v970 = vadd.f32 %v311, %v969
  %v971 = vpop.f32.mrb[0].mxu0
  %v972 = vadd.f32 %v316, %v971
  %v973 = vpop.f32.mrb[0].mxu0
  %v974 = vadd.f32 %v316, %v973
  %975 = vmatprep.mubr.bf16.mxu0 0
  %976 = vmatmul.mubr.bf16.gmra.mrb[0].mxu0 %v716
  %v977 = vpop.f32.mrb[0].mxu0
  %v978 = vadd.f32 %v321, %v977
  %v979 = vpop.f32.mrb[0].mxu0
  %v980 = vadd.f32 %v321, %v979
  %v981 = vpop.f32.mrb[0].mxu0
  %v982 = vadd.f32 %v326, %v981
  %v983 = vpop.f32.mrb[0].mxu0
  %v984 = vadd.f32 %v326, %v983
  %985 = vmatprep.mubr.bf16.mxu0 0
  %986 = vmatmul.mubr.bf16.gmra.mrb[0].mxu0 %v719
  %v987 = vpop.f32.mrb[0].mxu0
  %v988 = vadd.f32 %v331, %v987
  %v989 = vpop.f32.mrb[0].mxu0
  %v990 = vadd.f32 %v331, %v989
  %v991 = vpop.f32.mrb[0].mxu0
  %v992 = vadd.f32 %v336, %v991
  %v993 = vpop.f32.mrb[0].mxu0
  %v994 = vadd.f32 %v336, %v993
  %995 = vmatprep.mubr.bf16.mxu0 0
  %996 = vmatmul.mubr.bf16.gmra.mrb[0].mxu0 %v722
  %v997 = vpop.f32.mrb[0].mxu0
  %v998 = vadd.f32 %v341, %v997
  %v999 = vpop.f32.mrb[0].mxu0
  %v1000 = vadd.f32 %v341, %v999
  %v1001 = vpop.f32.mrb[0].mxu0
  %v1002 = vadd.f32 %v346, %v1001
  %v1003 = vpop.f32.mrb[0].mxu0
  %v1004 = vadd.f32 %v346, %v1003
  %1005 = vmatprep.mubr.bf16.mxu0 0
  %1006 = vmatmul.mubr.bf16.gmra.mrb[0].mxu0 %v725
  %v1007 = vpop.f32.mrb[0].mxu0
  %v1008 = vadd.f32 %v351, %v1007
  %v1009 = vpop.f32.mrb[0].mxu0
  %v1010 = vadd.f32 %v351, %v1009
  %v1011 = vpop.f32.mrb[0].mxu0
  %v1012 = vadd.f32 %v356, %v1011
  %v1013 = vpop.f32.mrb[0].mxu0
  %v1014 = vadd.f32 %v356, %v1013
  %1015 = vmatprep.mubr.bf16.mxu0 0
  %1016 = vmatmul.mubr.bf16.gmra.mrb[0].mxu0 %v728
  %v1017 = vpop.f32.mrb[0].mxu0
  %v1018 = vadd.f32 %v361, %v1017
  %v1019 = vpop.f32.mrb[0].mxu0
  %v1020 = vadd.f32 %v361, %v1019
  %v1021 = vpop.f32.mrb[0].mxu0
  %v1022 = vadd.f32 %v366, %v1021
  %v1023 = vpop.f32.mrb[0].mxu0
  %v1024 = vadd.f32 %v366, %v1023
  %1025 = vmatprep.mubr.bf16.mxu0 0
  %1026 = vmatmul.mubr.bf16.gmra.mrb[0].mxu0 %v731
  %v1027 = vpop.f32.mrb[0].mxu0
  %v1028 = vadd.f32 %v371, %v1027
  %v1029 = vpop.f32.mrb[0].mxu0
  %v1030 = vadd.f32 %v371, %v1029
  %v1031 = vpop.f32.mrb[0].mxu0
  %v1032 = vadd.f32 %v376, %v1031
  %v1033 = vpop.f32.mrb[0].mxu0
  %v1034 = vadd.f32 %v376, %v1033
  %1035 = vmatprep.mubr.bf16.mxu0 0
  %1036 = vmatmul.mubr.bf16.gmra.mrb[0].mxu0 %v734
  %v1037 = vpop.f32.mrb[0].mxu0
  %v1038 = vadd.f32 %v381, %v1037
  %v1039 = vpop.f32.mrb[0].mxu0
  %v1040 = vadd.f32 %v381, %v1039
  %v1041 = vpop.f32.mrb[0].mxu0
  %v1042 = vadd.f32 %v386, %v1041
  %v1043 = vpop.f32.mrb[0].mxu0
  %v1044 = vadd.f32 %v386, %v1043
  %1045 = vmatprep.mubr.bf16.mxu0 0
  %1046 = vmatmul.mubr.bf16.gmra.mrb[0].mxu0 %v737
  %v1047 = vpop.f32.mrb[0].mxu0
  %v1048 = vadd.f32 %v391, %v1047
  %v1049 = vpop.f32.mrb[0].mxu0
  %v1050 = vadd.f32 %v391, %v1049
  %v1051 = vpop.f32.mrb[0].mxu0
  %v1052 = vadd.f32 %v396, %v1051
  %v1053 = vpop.f32.mrb[0].mxu0
  %v1054 = vadd.f32 %v396, %v1053
  %1055 = vmatprep.mubr.bf16.mxu0 0
  %1056 = vmatmul.mubr.bf16.gmra.mrb[0].mxu0 %v740
  %v1057 = vpop.f32.mrb[0].mxu0
  %v1058 = vadd.f32 %v401, %v1057
  %v1059 = vpop.f32.mrb[0].mxu0
  %v1060 = vadd.f32 %v401, %v1059
  %v1061 = vpop.f32.mrb[0].mxu0
  %v1062 = vadd.f32 %v406, %v1061
  %v1063 = vpop.f32.mrb[0].mxu0
  %v1064 = vadd.f32 %v406, %v1063
  %1065 = vmatprep.mubr.bf16.mxu0 0
  %1066 = vmatmul.mubr.bf16.gmra.mrb[0].mxu0 %v743
  %v1067 = vpop.f32.mrb[0].mxu0
  %v1068 = vadd.f32 %v411, %v1067
  %v1069 = vpop.f32.mrb[0].mxu0
  %v1070 = vadd.f32 %v411, %v1069
  %v1071 = vpop.f32.mrb[0].mxu0
  %v1072 = vadd.f32 %v416, %v1071
  %v1073 = vpop.f32.mrb[0].mxu0
  %v1074 = vadd.f32 %v416, %v1073
  %1075 = vmatprep.mubr.bf16.mxu0 0
  %1076 = vmatmul.mubr.bf16.gmra.mrb[0].mxu0 %v746
  %v1077 = vpop.f32.mrb[0].mxu0
  %v1078 = vadd.f32 %v421, %v1077
  %v1079 = vpop.f32.mrb[0].mxu0
  %v1080 = vadd.f32 %v421, %v1079
  %v1081 = vpop.f32.mrb[0].mxu0
  %v1082 = vadd.f32 %v426, %v1081
  %v1083 = vpop.f32.mrb[0].mxu0
  %v1084 = vadd.f32 %v426, %v1083
  %1085 = vmatprep.mubr.bf16.mxu0 0
  %1086 = vmatmul.mubr.bf16.gmra.mrb[0].mxu0 %v749
  %v1087 = vpop.f32.mrb[0].mxu0
  %v1088 = vadd.f32 %v431, %v1087
  %v1089 = vpop.f32.mrb[0].mxu0
  %v1090 = vadd.f32 %v431, %v1089
  %v1091 = vpop.f32.mrb[0].mxu0
  %v1092 = vadd.f32 %v436, %v1091
  %v1093 = vpop.f32.mrb[0].mxu0
  %v1094 = vadd.f32 %v436, %v1093
  %1095 = vmatprep.mubr.bf16.mxu0 0
  %1096 = vmatmul.mubr.bf16.gmra.mrb[0].mxu0 %v752
  %v1097 = vpop.f32.mrb[0].mxu0
  %v1098 = vadd.f32 %v441, %v1097
  %v1099 = vpop.f32.mrb[0].mxu0
  %v1100 = vadd.f32 %v441, %v1099
  %v1101 = vpop.f32.mrb[0].mxu0
  %v1102 = vadd.f32 %v446, %v1101
  %v1103 = vpop.f32.mrb[0].mxu0
  %v1104 = vadd.f32 %v446, %v1103
  %1105 = vmatprep.mubr.bf16.mxu0 0
  %1106 = vmatmul.mubr.bf16.gmra.mrb[0].mxu0 %v755
  %v1107 = vpop.f32.mrb[0].mxu0
  %v1108 = vadd.f32 %v451, %v1107
  %v1109 = vpop.f32.mrb[0].mxu0
  %v1110 = vadd.f32 %v451, %v1109
  %v1111 = vpop.f32.mrb[0].mxu0
  %v1112 = vadd.f32 %v456, %v1111
  %v1113 = vpop.f32.mrb[0].mxu0
  %v1114 = vadd.f32 %v456, %v1113
  %1115 = vmatprep.mubr.bf16.mxu0 0
  %1116 = vmatmul.mubr.bf16.gmra.mrb[0].mxu0 %v758
  %v1117 = vpop.f32.mrb[0].mxu0
  %v1118 = vadd.f32 %v461, %v1117
  %v1119 = vpop.f32.mrb[0].mxu0
  %v1120 = vadd.f32 %v461, %v1119
  %v1121 = vpop.f32.mrb[0].mxu0
  %v1122 = vadd.f32 %v466, %v1121
  %v1123 = vpop.f32.mrb[0].mxu0
  %v1124 = vadd.f32 %v466, %v1123
  %1125 = vmatprep.mubr.bf16.mxu0 0
  %1126 = vmatmul.mubr.bf16.gmra.mrb[0].mxu0 %v761
  %v1127 = vpop.f32.mrb[0].mxu0
  %v1128 = vadd.f32 %v471, %v1127
  %v1129 = vpop.f32.mrb[0].mxu0
  %v1130 = vadd.f32 %v471, %v1129
  %v1131 = vpop.f32.mrb[0].mxu0
  %v1132 = vadd.f32 %v476, %v1131
  %v1133 = vpop.f32.mrb[0].mxu0
  %v1134 = vadd.f32 %v476, %v1133
  %1135 = vmatprep.mubr.bf16.mxu0 0
  %1136 = vmatmul.mubr.bf16.gmra.mrb[0].mxu0 %v764
  %v1137 = vpop.f32.mrb[0].mxu0
  %v1138 = vadd.f32 %v481, %v1137
  %v1139 = vpop.f32.mrb[0].mxu0
  %v1140 = vadd.f32 %v481, %v1139
  %v1141 = vpop.f32.mrb[0].mxu0
  %v1142 = vadd.f32 %v486, %v1141
  %v1143 = vpop.f32.mrb[0].mxu0
  %v1144 = vadd.f32 %v486, %v1143
  %1145 = vmatprep.mubr.bf16.mxu0 0
  %1146 = vmatmul.mubr.bf16.gmra.mrb[0].mxu0 %v767
  %v1147 = vpop.f32.mrb[0].mxu0
  %v1148 = vadd.f32 %v491, %v1147
  %v1149 = vpop.f32.mrb[0].mxu0
  %v1150 = vadd.f32 %v491, %v1149
  %v1151 = vpop.f32.mrb[0].mxu0
  %v1152 = vadd.f32 %v496, %v1151
  %v1153 = vpop.f32.mrb[0].mxu0
  %v1154 = vadd.f32 %v496, %v1153
  %1155 = vmatprep.mubr.bf16.mxu0 0
  %1156 = vmatmul.mubr.bf16.gmra.mrb[0].mxu0 %v770
  %v1157 = vpop.f32.mrb[0].mxu0
  %v1158 = vadd.f32 %v501, %v1157
  %v1159 = vpop.f32.mrb[0].mxu0
  %v1160 = vadd.f32 %v501, %v1159
  %v1161 = vpop.f32.mrb[0].mxu0
  %v1162 = vadd.f32 %v506, %v1161
  %v1163 = vpop.f32.mrb[0].mxu0
  %v1164 = vadd.f32 %v506, %v1163
  %1165 = vmatprep.mubr.bf16.mxu0 0
  %1166 = vmatmul.mubr.bf16.gmra.mrb[0].mxu0 %v773
  %v1167 = vpop.f32.mrb[0].mxu0
  %v1168 = vadd.f32 %v511, %v1167
  %v1169 = vpop.f32.mrb[0].mxu0
  %v1170 = vadd.f32 %v511, %v1169
  %v1171 = vpop.f32.mrb[0].mxu0
  %v1172 = vadd.f32 %v516, %v1171
  %v1173 = vpop.f32.mrb[0].mxu0
  %v1174 = vadd.f32 %v516, %v1173
  %1175 = vdwg.mxu0
  %vm1176 = vcmp.gt.f32.partialorder %v858, 0.0
  %vm1177 = vcmp.gt.f32.partialorder %v860, 0.0
  %vm1178 = vcmp.gt.f32.partialorder %v862, 0.0
  %vm1179 = vcmp.gt.f32.partialorder %v864, 0.0
  %vm1180 = vcmp.gt.f32.partialorder %v868, 0.0
  %vm1181 = vcmp.gt.f32.partialorder %v870, 0.0
  %vm1182 = vcmp.gt.f32.partialorder %v872, 0.0
  %vm1183 = vcmp.gt.f32.partialorder %v874, 0.0
  %vm1184 = vcmp.gt.f32.partialorder %v878, 0.0
  %vm1185 = vcmp.gt.f32.partialorder %v880, 0.0
  %vm1186 = vcmp.gt.f32.partialorder %v882, 0.0
  %vm1187 = vcmp.gt.f32.partialorder %v884, 0.0
  %vm1188 = vcmp.gt.f32.partialorder %v888, 0.0
  %vm1189 = vcmp.gt.f32.partialorder %v890, 0.0
  %vm1190 = vcmp.gt.f32.partialorder %v892, 0.0
  %vm1191 = vcmp.gt.f32.partialorder %v894, 0.0
  %vm1192 = vcmp.gt.f32.partialorder %v898, 0.0
  %vm1193 = vcmp.gt.f32.partialorder %v900, 0.0
  %vm1194 = vcmp.gt.f32.partialorder %v902, 0.0
  %vm1195 = vcmp.gt.f32.partialorder %v904, 0.0
  %vm1196 = vcmp.gt.f32.partialorder %v908, 0.0
  %vm1197 = vcmp.gt.f32.partialorder %v910, 0.0
  %vm1198 = vcmp.gt.f32.partialorder %v912, 0.0
  %vm1199 = vcmp.gt.f32.partialorder %v914, 0.0
  %vm1200 = vcmp.gt.f32.partialorder %v918, 0.0
  %vm1201 = vcmp.gt.f32.partialorder %v920, 0.0
  %vm1202 = vcmp.gt.f32.partialorder %v922, 0.0
  %vm1203 = vcmp.gt.f32.partialorder %v924, 0.0
  %vm1204 = vcmp.gt.f32.partialorder %v928, 0.0
  %vm1205 = vcmp.gt.f32.partialorder %v930, 0.0
  %vm1206 = vcmp.gt.f32.partialorder %v932, 0.0
  %vm1207 = vcmp.gt.f32.partialorder %v934, 0.0
  %vm1208 = vcmp.gt.f32.partialorder %v938, 0.0
  %vm1209 = vcmp.gt.f32.partialorder %v940, 0.0
  %vm1210 = vcmp.gt.f32.partialorder %v942, 0.0
  %vm1211 = vcmp.gt.f32.partialorder %v944, 0.0
  %vm1212 = vcmp.gt.f32.partialorder %v948, 0.0
  %vm1213 = vcmp.gt.f32.partialorder %v950, 0.0
  %vm1214 = vcmp.gt.f32.partialorder %v952, 0.0
  %vm1215 = vcmp.gt.f32.partialorder %v954, 0.0
  %vm1216 = vcmp.gt.f32.partialorder %v958, 0.0
  %vm1217 = vcmp.gt.f32.partialorder %v960, 0.0
  %vm1218 = vcmp.gt.f32.partialorder %v962, 0.0
  %vm1219 = vcmp.gt.f32.partialorder %v964, 0.0
  %vm1220 = vcmp.gt.f32.partialorder %v968, 0.0
  %vm1221 = vcmp.gt.f32.partialorder %v970, 0.0
  %vm1222 = vcmp.gt.f32.partialorder %v972, 0.0
  %vm1223 = vcmp.gt.f32.partialorder %v974, 0.0
  %vm1224 = vcmp.gt.f32.partialorder %v978, 0.0
  %vm1225 = vcmp.gt.f32.partialorder %v980, 0.0
  %vm1226 = vcmp.gt.f32.partialorder %v982, 0.0
  %vm1227 = vcmp.gt.f32.partialorder %v984, 0.0
  %vm1228 = vcmp.gt.f32.partialorder %v988, 0.0
  %vm1229 = vcmp.gt.f32.partialorder %v990, 0.0
  %vm1230 = vcmp.gt.f32.partialorder %v992, 0.0
  %vm1231 = vcmp.gt.f32.partialorder %v994, 0.0
  %vm1232 = vcmp.gt.f32.partialorder %v998, 0.0
  %vm1233 = vcmp.gt.f32.partialorder %v1000, 0.0
  %vm1234 = vcmp.gt.f32.partialorder %v1002, 0.0
  %vm1235 = vcmp.gt.f32.partialorder %v1004, 0.0
  %vm1236 = vcmp.gt.f32.partialorder %v1008, 0.0
  %vm1237 = vcmp.gt.f32.partialorder %v1010, 0.0
  %vm1238 = vcmp.gt.f32.partialorder %v1012, 0.0
  %vm1239 = vcmp.gt.f32.partialorder %v1014, 0.0
  %vm1240 = vcmp.gt.f32.partialorder %v1018, 0.0
  %vm1241 = vcmp.gt.f32.partialorder %v1020, 0.0
  %vm1242 = vcmp.gt.f32.partialorder %v1022, 0.0
  %vm1243 = vcmp.gt.f32.partialorder %v1024, 0.0
  %vm1244 = vcmp.gt.f32.partialorder %v1028, 0.0
  %vm1245 = vcmp.gt.f32.partialorder %v1030, 0.0
  %vm1246 = vcmp.gt.f32.partialorder %v1032, 0.0
  %vm1247 = vcmp.gt.f32.partialorder %v1034, 0.0
  %vm1248 = vcmp.gt.f32.partialorder %v1038, 0.0
  %vm1249 = vcmp.gt.f32.partialorder %v1040, 0.0
  %vm1250 = vcmp.gt.f32.partialorder %v1042, 0.0
  %vm1251 = vcmp.gt.f32.partialorder %v1044, 0.0
  %vm1252 = vcmp.gt.f32.partialorder %v1048, 0.0
  %vm1253 = vcmp.gt.f32.partialorder %v1050, 0.0
  %vm1254 = vcmp.gt.f32.partialorder %v1052, 0.0
  %vm1255 = vcmp.gt.f32.partialorder %v1054, 0.0
  %vm1256 = vcmp.gt.f32.partialorder %v1058, 0.0
  %vm1257 = vcmp.gt.f32.partialorder %v1060, 0.0
  %vm1258 = vcmp.gt.f32.partialorder %v1062, 0.0
  %vm1259 = vcmp.gt.f32.partialorder %v1064, 0.0
  %vm1260 = vcmp.gt.f32.partialorder %v1068, 0.0
  %vm1261 = vcmp.gt.f32.partialorder %v1070, 0.0
  %vm1262 = vcmp.gt.f32.partialorder %v1072, 0.0
  %vm1263 = vcmp.gt.f32.partialorder %v1074, 0.0
  %vm1264 = vcmp.gt.f32.partialorder %v1078, 0.0
  %vm1265 = vcmp.gt.f32.partialorder %v1080, 0.0
  %vm1266 = vcmp.gt.f32.partialorder %v1082, 0.0
  %vm1267 = vcmp.gt.f32.partialorder %v1084, 0.0
  %vm1268 = vcmp.gt.f32.partialorder %v1088, 0.0
  %vm1269 = vcmp.gt.f32.partialorder %v1090, 0.0
  %vm1270 = vcmp.gt.f32.partialorder %v1092, 0.0
  %vm1271 = vcmp.gt.f32.partialorder %v1094, 0.0
  %vm1272 = vcmp.gt.f32.partialorder %v1098, 0.0
  %vm1273 = vcmp.gt.f32.partialorder %v1100, 0.0
  %vm1274 = vcmp.gt.f32.partialorder %v1102, 0.0
  %vm1275 = vcmp.gt.f32.partialorder %v1104, 0.0
  %vm1276 = vcmp.gt.f32.partialorder %v1108, 0.0
  %vm1277 = vcmp.gt.f32.partialorder %v1110, 0.0
  %vm1278 = vcmp.gt.f32.partialorder %v1112, 0.0
  %vm1279 = vcmp.gt.f32.partialorder %v1114, 0.0
  %vm1280 = vcmp.gt.f32.partialorder %v1118, 0.0
  %vm1281 = vcmp.gt.f32.partialorder %v1120, 0.0
  %vm1282 = vcmp.gt.f32.partialorder %v1122, 0.0
  %vm1283 = vcmp.gt.f32.partialorder %v1124, 0.0
  %vm1284 = vcmp.gt.f32.partialorder %v1128, 0.0
  %vm1285 = vcmp.gt.f32.partialorder %v1130, 0.0
  %vm1286 = vcmp.gt.f32.partialorder %v1132, 0.0
  %vm1287 = vcmp.gt.f32.partialorder %v1134, 0.0
  %vm1288 = vcmp.gt.f32.partialorder %v1138, 0.0
  %vm1289 = vcmp.gt.f32.partialorder %v1140, 0.0
  %vm1290 = vcmp.gt.f32.partialorder %v1142, 0.0
  %vm1291 = vcmp.gt.f32.partialorder %v1144, 0.0
  %vm1292 = vcmp.gt.f32.partialorder %v1148, 0.0
  %vm1293 = vcmp.gt.f32.partialorder %v1150, 0.0
  %vm1294 = vcmp.gt.f32.partialorder %v1152, 0.0
  %vm1295 = vcmp.gt.f32.partialorder %v1154, 0.0
  %vm1296 = vcmp.gt.f32.partialorder %v1158, 0.0
  %vm1297 = vcmp.gt.f32.partialorder %v1160, 0.0
  %vm1298 = vcmp.gt.f32.partialorder %v1162, 0.0
  %vm1299 = vcmp.gt.f32.partialorder %v1164, 0.0
  %vm1300 = vcmp.gt.f32.partialorder %v1168, 0.0
  %vm1301 = vcmp.gt.f32.partialorder %v1170, 0.0
  %vm1302 = vcmp.gt.f32.partialorder %v1172, 0.0
  %vm1303 = vcmp.gt.f32.partialorder %v1174, 0.0
  %v1304 = vmul.f32 %v858, 0.2
  %v1305 = vmul.f32 %v860, 0.2
  %v1306 = vmul.f32 %v862, 0.2
  %v1307 = vmul.f32 %v864, 0.2
  %v1308 = vmul.f32 %v868, 0.2
  %v1309 = vmul.f32 %v870, 0.2
  %v1310 = vmul.f32 %v872, 0.2
  %v1311 = vmul.f32 %v874, 0.2
  %v1312 = vmul.f32 %v878, 0.2
  %v1313 = vmul.f32 %v880, 0.2
  %v1314 = vmul.f32 %v882, 0.2
  %v1315 = vmul.f32 %v884, 0.2
  %v1316 = vmul.f32 %v888, 0.2
  %v1317 = vmul.f32 %v890, 0.2
  %v1318 = vmul.f32 %v892, 0.2
  %v1319 = vmul.f32 %v894, 0.2
  %v1320 = vmul.f32 %v898, 0.2
  %v1321 = vmul.f32 %v900, 0.2
  %v1322 = vmul.f32 %v902, 0.2
  %v1323 = vmul.f32 %v904, 0.2
  %v1324 = vmul.f32 %v908, 0.2
  %v1325 = vmul.f32 %v910, 0.2
  %v1326 = vmul.f32 %v912, 0.2
  %v1327 = vmul.f32 %v914, 0.2
  %v1328 = vmul.f32 %v918, 0.2
  %v1329 = vmul.f32 %v920, 0.2
  %v1330 = vmul.f32 %v922, 0.2
  %v1331 = vmul.f32 %v924, 0.2
  %v1332 = vmul.f32 %v928, 0.2
  %v1333 = vmul.f32 %v930, 0.2
  %v1334 = vmul.f32 %v932, 0.2
  %v1335 = vmul.f32 %v934, 0.2
  %v1336 = vmul.f32 %v938, 0.2
  %v1337 = vmul.f32 %v940, 0.2
  %v1338 = vmul.f32 %v942, 0.2
  %v1339 = vmul.f32 %v944, 0.2
  %v1340 = vmul.f32 %v948, 0.2
  %v1341 = vmul.f32 %v950, 0.2
  %v1342 = vmul.f32 %v952, 0.2
  %v1343 = vmul.f32 %v954, 0.2
  %v1344 = vmul.f32 %v958, 0.2
  %v1345 = vmul.f32 %v960, 0.2
  %v1346 = vmul.f32 %v962, 0.2
  %v1347 = vmul.f32 %v964, 0.2
  %v1348 = vmul.f32 %v968, 0.2
  %v1349 = vmul.f32 %v970, 0.2
  %v1350 = vmul.f32 %v972, 0.2
  %v1351 = vmul.f32 %v974, 0.2
  %v1352 = vmul.f32 %v978, 0.2
  %v1353 = vmul.f32 %v980, 0.2
  %v1354 = vmul.f32 %v982, 0.2
  %v1355 = vmul.f32 %v984, 0.2
  %v1356 = vmul.f32 %v988, 0.2
  %v1357 = vmul.f32 %v990, 0.2
  %v1358 = vmul.f32 %v992, 0.2
  %v1359 = vmul.f32 %v994, 0.2
  %v1360 = vmul.f32 %v998, 0.2
  %v1361 = vmul.f32 %v1000, 0.2
  %v1362 = vmul.f32 %v1002, 0.2
  %v1363 = vmul.f32 %v1004, 0.2
  %v1364 = vmul.f32 %v1008, 0.2
  %v1365 = vmul.f32 %v1010, 0.2
  %v1366 = vmul.f32 %v1012, 0.2
  %v1367 = vmul.f32 %v1014, 0.2
  %v1368 = vmul.f32 %v1018, 0.2
  %v1369 = vmul.f32 %v1020, 0.2
  %v1370 = vmul.f32 %v1022, 0.2
  %v1371 = vmul.f32 %v1024, 0.2
  %v1372 = vmul.f32 %v1028, 0.2
  %v1373 = vmul.f32 %v1030, 0.2
  %v1374 = vmul.f32 %v1032, 0.2
  %v1375 = vmul.f32 %v1034, 0.2
  %v1376 = vmul.f32 %v1038, 0.2
  %v1377 = vmul.f32 %v1040, 0.2
  %v1378 = vmul.f32 %v1042, 0.2
  %v1379 = vmul.f32 %v1044, 0.2
  %v1380 = vmul.f32 %v1048, 0.2
  %v1381 = vmul.f32 %v1050, 0.2
  %v1382 = vmul.f32 %v1052, 0.2
  %v1383 = vmul.f32 %v1054, 0.2
  %v1384 = vmul.f32 %v1058, 0.2
  %v1385 = vmul.f32 %v1060, 0.2
  %v1386 = vmul.f32 %v1062, 0.2
  %v1387 = vmul.f32 %v1064, 0.2
  %v1388 = vmul.f32 %v1068, 0.2
  %v1389 = vmul.f32 %v1070, 0.2
  %v1390 = vmul.f32 %v1072, 0.2
  %v1391 = vmul.f32 %v1074, 0.2
  %v1392 = vmul.f32 %v1078, 0.2
  %v1393 = vmul.f32 %v1080, 0.2
  %v1394 = vmul.f32 %v1082, 0.2
  %v1395 = vmul.f32 %v1084, 0.2
  %v1396 = vmul.f32 %v1088, 0.2
  %v1397 = vmul.f32 %v1090, 0.2
  %v1398 = vmul.f32 %v1092, 0.2
  %v1399 = vmul.f32 %v1094, 0.2
  %v1400 = vmul.f32 %v1098, 0.2
  %v1401 = vmul.f32 %v1100, 0.2
  %v1402 = vmul.f32 %v1102, 0.2
  %v1403 = vmul.f32 %v1104, 0.2
  %v1404 = vmul.f32 %v1108, 0.2
  %v1405 = vmul.f32 %v1110, 0.2
  %v1406 = vmul.f32 %v1112, 0.2
  %v1407 = vmul.f32 %v1114, 0.2
  %v1408 = vmul.f32 %v1118, 0.2
  %v1409 = vmul.f32 %v1120, 0.2
  %v1410 = vmul.f32 %v1122, 0.2
  %v1411 = vmul.f32 %v1124, 0.2
  %v1412 = vmul.f32 %v1128, 0.2
  %v1413 = vmul.f32 %v1130, 0.2
  %v1414 = vmul.f32 %v1132, 0.2
  %v1415 = vmul.f32 %v1134, 0.2
  %v1416 = vmul.f32 %v1138, 0.2
  %v1417 = vmul.f32 %v1140, 0.2
  %v1418 = vmul.f32 %v1142, 0.2
  %v1419 = vmul.f32 %v1144, 0.2
  %v1420 = vmul.f32 %v1148, 0.2
  %v1421 = vmul.f32 %v1150, 0.2
  %v1422 = vmul.f32 %v1152, 0.2
  %v1423 = vmul.f32 %v1154, 0.2
  %v1424 = vmul.f32 %v1158, 0.2
  %v1425 = vmul.f32 %v1160, 0.2
  %v1426 = vmul.f32 %v1162, 0.2
  %v1427 = vmul.f32 %v1164, 0.2
  %v1428 = vmul.f32 %v1168, 0.2
  %v1429 = vmul.f32 %v1170, 0.2
  %v1430 = vmul.f32 %v1172, 0.2
  %v1431 = vmul.f32 %v1174, 0.2
  %v1432 = vsel %vm1176, %v858, %v1304
  %v1433 = vsel %vm1177, %v860, %v1305
  %v1434 = vsel %vm1178, %v862, %v1306
  %v1435 = vsel %vm1179, %v864, %v1307
  %v1436 = vsel %vm1180, %v868, %v1308
  %v1437 = vsel %vm1181, %v870, %v1309
  %v1438 = vsel %vm1182, %v872, %v1310
  %v1439 = vsel %vm1183, %v874, %v1311
  %v1440 = vsel %vm1184, %v878, %v1312
  %v1441 = vsel %vm1185, %v880, %v1313
  %v1442 = vsel %vm1186, %v882, %v1314
  %v1443 = vsel %vm1187, %v884, %v1315
  %v1444 = vsel %vm1188, %v888, %v1316
  %v1445 = vsel %vm1189, %v890, %v1317
  %v1446 = vsel %vm1190, %v892, %v1318
  %v1447 = vsel %vm1191, %v894, %v1319
  %v1448 = vsel %vm1192, %v898, %v1320
  %v1449 = vsel %vm1193, %v900, %v1321
  %v1450 = vsel %vm1194, %v902, %v1322
  %v1451 = vsel %vm1195, %v904, %v1323
  %v1452 = vsel %vm1196, %v908, %v1324
  %v1453 = vsel %vm1197, %v910, %v1325
  %v1454 = vsel %vm1198, %v912, %v1326
  %v1455 = vsel %vm1199, %v914, %v1327
  %v1456 = vsel %vm1200, %v918, %v1328
  %v1457 = vsel %vm1201, %v920, %v1329
  %v1458 = vsel %vm1202, %v922, %v1330
  %v1459 = vsel %vm1203, %v924, %v1331
  %v1460 = vsel %vm1204, %v928, %v1332
  %v1461 = vsel %vm1205, %v930, %v1333
  %v1462 = vsel %vm1206, %v932, %v1334
  %v1463 = vsel %vm1207, %v934, %v1335
  %v1464 = vsel %vm1208, %v938, %v1336
  %v1465 = vsel %vm1209, %v940, %v1337
  %v1466 = vsel %vm1210, %v942, %v1338
  %v1467 = vsel %vm1211, %v944, %v1339
  %v1468 = vsel %vm1212, %v948, %v1340
  %v1469 = vsel %vm1213, %v950, %v1341
  %v1470 = vsel %vm1214, %v952, %v1342
  %v1471 = vsel %vm1215, %v954, %v1343
  %v1472 = vsel %vm1216, %v958, %v1344
  %v1473 = vsel %vm1217, %v960, %v1345
  %v1474 = vsel %vm1218, %v962, %v1346
  %v1475 = vsel %vm1219, %v964, %v1347
  %v1476 = vsel %vm1220, %v968, %v1348
  %v1477 = vsel %vm1221, %v970, %v1349
  %v1478 = vsel %vm1222, %v972, %v1350
  %v1479 = vsel %vm1223, %v974, %v1351
  %v1480 = vsel %vm1224, %v978, %v1352
  %v1481 = vsel %vm1225, %v980, %v1353
  %v1482 = vsel %vm1226, %v982, %v1354
  %v1483 = vsel %vm1227, %v984, %v1355
  %v1484 = vsel %vm1228, %v988, %v1356
  %v1485 = vsel %vm1229, %v990, %v1357
  %v1486 = vsel %vm1230, %v992, %v1358
  %v1487 = vsel %vm1231, %v994, %v1359
  %v1488 = vsel %vm1232, %v998, %v1360
  %v1489 = vsel %vm1233, %v1000, %v1361
  %v1490 = vsel %vm1234, %v1002, %v1362
  %v1491 = vsel %vm1235, %v1004, %v1363
  %v1492 = vsel %vm1236, %v1008, %v1364
  %v1493 = vsel %vm1237, %v1010, %v1365
  %v1494 = vsel %vm1238, %v1012, %v1366
  %v1495 = vsel %vm1239, %v1014, %v1367
  %v1496 = vsel %vm1240, %v1018, %v1368
  %v1497 = vsel %vm1241, %v1020, %v1369
  %v1498 = vsel %vm1242, %v1022, %v1370
  %v1499 = vsel %vm1243, %v1024, %v1371
  %v1500 = vsel %vm1244, %v1028, %v1372
  %v1501 = vsel %vm1245, %v1030, %v1373
  %v1502 = vsel %vm1246, %v1032, %v1374
  %v1503 = vsel %vm1247, %v1034, %v1375
  %v1504 = vsel %vm1248, %v1038, %v1376
  %v1505 = vsel %vm1249, %v1040, %v1377
  %v1506 = vsel %vm1250, %v1042, %v1378
  %v1507 = vsel %vm1251, %v1044, %v1379
  %v1508 = vsel %vm1252, %v1048, %v1380
  %v1509 = vsel %vm1253, %v1050, %v1381
  %v1510 = vsel %vm1254, %v1052, %v1382
  %v1511 = vsel %vm1255, %v1054, %v1383
  %v1512 = vsel %vm1256, %v1058, %v1384
  %v1513 = vsel %vm1257, %v1060, %v1385
  %v1514 = vsel %vm1258, %v1062, %v1386
  %v1515 = vsel %vm1259, %v1064, %v1387
  %v1516 = vsel %vm1260, %v1068, %v1388
  %v1517 = vsel %vm1261, %v1070, %v1389
  %v1518 = vsel %vm1262, %v1072, %v1390
  %v1519 = vsel %vm1263, %v1074, %v1391
  %v1520 = vsel %vm1264, %v1078, %v1392
  %v1521 = vsel %vm1265, %v1080, %v1393
  %v1522 = vsel %vm1266, %v1082, %v1394
  %v1523 = vsel %vm1267, %v1084, %v1395
  %v1524 = vsel %vm1268, %v1088, %v1396
  %v1525 = vsel %vm1269, %v1090, %v1397
  %v1526 = vsel %vm1270, %v1092, %v1398
  %v1527 = vsel %vm1271, %v1094, %v1399
  %v1528 = vsel %vm1272, %v1098, %v1400
  %v1529 = vsel %vm1273, %v1100, %v1401
  %v1530 = vsel %vm1274, %v1102, %v1402
  %v1531 = vsel %vm1275, %v1104, %v1403
  %v1532 = vsel %vm1276, %v1108, %v1404
  %v1533 = vsel %vm1277, %v1110, %v1405
  %v1534 = vsel %vm1278, %v1112, %v1406
  %v1535 = vsel %vm1279, %v1114, %v1407
  %v1536 = vsel %vm1280, %v1118, %v1408
  %v1537 = vsel %vm1281, %v1120, %v1409
  %v1538 = vsel %vm1282, %v1122, %v1410
  %v1539 = vsel %vm1283, %v1124, %v1411
  %v1540 = vsel %vm1284, %v1128, %v1412
  %v1541 = vsel %vm1285, %v1130, %v1413
  %v1542 = vsel %vm1286, %v1132, %v1414
  %v1543 = vsel %vm1287, %v1134, %v1415
  %v1544 = vsel %vm1288, %v1138, %v1416
  %v1545 = vsel %vm1289, %v1140, %v1417
  %v1546 = vsel %vm1290, %v1142, %v1418
  %v1547 = vsel %vm1291, %v1144, %v1419
  %v1548 = vsel %vm1292, %v1148, %v1420
  %v1549 = vsel %vm1293, %v1150, %v1421
  %v1550 = vsel %vm1294, %v1152, %v1422
  %v1551 = vsel %vm1295, %v1154, %v1423
  %v1552 = vsel %vm1296, %v1158, %v1424
  %v1553 = vsel %vm1297, %v1160, %v1425
  %v1554 = vsel %vm1298, %v1162, %v1426
  %v1555 = vsel %vm1299, %v1164, %v1427
  %v1556 = vsel %vm1300, %v1168, %v1428
  %v1557 = vsel %vm1301, %v1170, %v1429
  %v1558 = vsel %vm1302, %v1172, %v1430
  %v1559 = vsel %vm1303, %v1174, %v1431
  %v1560 = vld [vmem:[%s2] sm:$0xff]
  %v1561 = vld [vmem:[%s2 + $0x8] sm:$0xff]
  %v1562 = vld [vmem:[%s2 + $0x10] sm:$0xff]
  %v1563 = vld [vmem:[%s2 + $0x18] sm:$0xff]
  %v1564 = vld [vmem:[%s2 + $0x20] sm:$0xff]
  %v1565 = vld [vmem:[%s2 + $0x28] sm:$0xff]
  %v1566 = vld [vmem:[%s2 + $0x30] sm:$0xff]
  %v1567 = vld [vmem:[%s2 + $0x38] sm:$0xff]
  %v1568 = vld [vmem:[%s2 + $0x40] sm:$0xff]
  %v1569 = vld [vmem:[%s2 + $0x48] sm:$0xff]
  %v1570 = vld [vmem:[%s2 + $0x50] sm:$0xff]
  %v1571 = vld [vmem:[%s2 + $0x58] sm:$0xff]
  %v1572 = vld [vmem:[%s2 + $0x60] sm:$0xff]
  %v1573 = vld [vmem:[%s2 + $0x68] sm:$0xff]
  %v1574 = vld [vmem:[%s2 + $0x70] sm:$0xff]
  %v1575 = vld [vmem:[%s2 + $0x78] sm:$0xff]
  %v1576 = vld [vmem:[%s2 + $0x80] sm:$0xff]
  %v1577 = vld [vmem:[%s2 + $0x88] sm:$0xff]
  %v1578 = vld [vmem:[%s2 + $0x90] sm:$0xff]
  %v1579 = vld [vmem:[%s2 + $0x98] sm:$0xff]
  %v1580 = vld [vmem:[%s2 + $0xa0] sm:$0xff]
  %v1581 = vld [vmem:[%s2 + $0xa8] sm:$0xff]
  %v1582 = vld [vmem:[%s2 + $0xb0] sm:$0xff]
  %v1583 = vld [vmem:[%s2 + $0xb8] sm:$0xff]
  %v1584 = vld [vmem:[%s2 + $0xc0] sm:$0xff]
  %v1585 = vld [vmem:[%s2 + $0xc8] sm:$0xff]
  %v1586 = vld [vmem:[%s2 + $0xd0] sm:$0xff]
  %v1587 = vld [vmem:[%s2 + $0xd8] sm:$0xff]
  %v1588 = vld [vmem:[%s2 + $0xe0] sm:$0xff]
  %v1589 = vld [vmem:[%s2 + $0xe8] sm:$0xff]
  %v1590 = vld [vmem:[%s2 + $0xf0] sm:$0xff]
  %v1591 = vld [vmem:[%s2 + $0xf8] sm:$0xff]
  %v1592 = vld [vmem:[%s2 + $0x100] sm:$0xff]
  %v1593 = vld [vmem:[%s2 + $0x108] sm:$0xff]
  %v1594 = vld [vmem:[%s2 + $0x110] sm:$0xff]
  %v1595 = vld [vmem:[%s2 + $0x118] sm:$0xff]
  %v1596 = vld [vmem:[%s2 + $0x120] sm:$0xff]
  %v1597 = vld [vmem:[%s2 + $0x128] sm:$0xff]
  %v1598 = vld [vmem:[%s2 + $0x130] sm:$0xff]
  %v1599 = vld [vmem:[%s2 + $0x138] sm:$0xff]
  %v1600 = vld [vmem:[%s2 + $0x140] sm:$0xff]
  %v1601 = vld [vmem:[%s2 + $0x148] sm:$0xff]
  %v1602 = vld [vmem:[%s2 + $0x150] sm:$0xff]
  %v1603 = vld [vmem:[%s2 + $0x158] sm:$0xff]
  %v1604 = vld [vmem:[%s2 + $0x160] sm:$0xff]
  %v1605 = vld [vmem:[%s2 + $0x168] sm:$0xff]
  %v1606 = vld [vmem:[%s2 + $0x170] sm:$0xff]
  %v1607 = vld [vmem:[%s2 + $0x178] sm:$0xff]
  %v1608 = vld [vmem:[%s2 + $0x180] sm:$0xff]
  %v1609 = vld [vmem:[%s2 + $0x188] sm:$0xff]
  %v1610 = vld [vmem:[%s2 + $0x190] sm:$0xff]
  %v1611 = vld [vmem:[%s2 + $0x198] sm:$0xff]
  %v1612 = vld [vmem:[%s2 + $0x1a0] sm:$0xff]
  %v1613 = vld [vmem:[%s2 + $0x1a8] sm:$0xff]
  %v1614 = vld [vmem:[%s2 + $0x1b0] sm:$0xff]
  %v1615 = vld [vmem:[%s2 + $0x1b8] sm:$0xff]
  %v1616 = vld [vmem:[%s2 + $0x1c0] sm:$0xff]
  %v1617 = vld [vmem:[%s2 + $0x1c8] sm:$0xff]
  %v1618 = vld [vmem:[%s2 + $0x1d0] sm:$0xff]
  %v1619 = vld [vmem:[%s2 + $0x1d8] sm:$0xff]
  %v1620 = vld [vmem:[%s2 + $0x1e0] sm:$0xff]
  %v1621 = vld [vmem:[%s2 + $0x1e8] sm:$0xff]
  %v1622 = vld [vmem:[%s2 + $0x1f0] sm:$0xff]
  %v1623 = vld [vmem:[%s2 + $0x1f8] sm:$0xff]
  %v1624 = vpack.c.bf16 %v1434, %v1432
  %v1625 = vpack.c.bf16 %v1435, %v1433
  %v1626 = vpack.c.bf16 %v1438, %v1436
  %v1627 = vpack.c.bf16 %v1439, %v1437
  %v1628 = vpack.c.bf16 %v1442, %v1440
  %v1629 = vpack.c.bf16 %v1443, %v1441
  %v1630 = vpack.c.bf16 %v1446, %v1444
  %v1631 = vpack.c.bf16 %v1447, %v1445
  %v1632 = vpack.c.bf16 %v1450, %v1448
  %v1633 = vpack.c.bf16 %v1451, %v1449
  %v1634 = vpack.c.bf16 %v1454, %v1452
  %v1635 = vpack.c.bf16 %v1455, %v1453
  %v1636 = vpack.c.bf16 %v1458, %v1456
  %v1637 = vpack.c.bf16 %v1459, %v1457
  %v1638 = vpack.c.bf16 %v1462, %v1460
  %v1639 = vpack.c.bf16 %v1463, %v1461
  %v1640 = vpack.c.bf16 %v1466, %v1464
  %v1641 = vpack.c.bf16 %v1467, %v1465
  %v1642 = vpack.c.bf16 %v1470, %v1468
  %v1643 = vpack.c.bf16 %v1471, %v1469
  %v1644 = vpack.c.bf16 %v1474, %v1472
  %v1645 = vpack.c.bf16 %v1475, %v1473
  %v1646 = vpack.c.bf16 %v1478, %v1476
  %v1647 = vpack.c.bf16 %v1479, %v1477
  %v1648 = vpack.c.bf16 %v1482, %v1480
  %v1649 = vpack.c.bf16 %v1483, %v1481
  %v1650 = vpack.c.bf16 %v1486, %v1484
  %v1651 = vpack.c.bf16 %v1487, %v1485
  %v1652 = vpack.c.bf16 %v1490, %v1488
  %v1653 = vpack.c.bf16 %v1491, %v1489
  %v1654 = vpack.c.bf16 %v1494, %v1492
  %v1655 = vpack.c.bf16 %v1495, %v1493
  %v1656 = vpack.c.bf16 %v1498, %v1496
  %v1657 = vpack.c.bf16 %v1499, %v1497
  %v1658 = vpack.c.bf16 %v1502, %v1500
  %v1659 = vpack.c.bf16 %v1503, %v1501
  %v1660 = vpack.c.bf16 %v1506, %v1504
  %v1661 = vpack.c.bf16 %v1507, %v1505
  %v1662 = vpack.c.bf16 %v1510, %v1508
  %v1663 = vpack.c.bf16 %v1511, %v1509
  %v1664 = vpack.c.bf16 %v1514, %v1512
  %v1665 = vpack.c.bf16 %v1515, %v1513
  %v1666 = vpack.c.bf16 %v1518, %v1516
  %v1667 = vpack.c.bf16 %v1519, %v1517
  %v1668 = vpack.c.bf16 %v1522, %v1520
  %v1669 = vpack.c.bf16 %v1523, %v1521
  %v1670 = vpack.c.bf16 %v1526, %v1524
  %v1671 = vpack.c.bf16 %v1527, %v1525
  %v1672 = vpack.c.bf16 %v1530, %v1528
  %v1673 = vpack.c.bf16 %v1531, %v1529
  %v1674 = vpack.c.bf16 %v1534, %v1532
  %v1675 = vpack.c.bf16 %v1535, %v1533
  %v1676 = vpack.c.bf16 %v1538, %v1536
  %v1677 = vpack.c.bf16 %v1539, %v1537
  %v1678 = vpack.c.bf16 %v1542, %v1540
  %v1679 = vpack.c.bf16 %v1543, %v1541
  %v1680 = vpack.c.bf16 %v1546, %v1544
  %v1681 = vpack.c.bf16 %v1547, %v1545
  %v1682 = vpack.c.bf16 %v1550, %v1548
  %v1683 = vpack.c.bf16 %v1551, %v1549
  %v1684 = vpack.c.bf16 %v1554, %v1552
  %v1685 = vpack.c.bf16 %v1555, %v1553
  %v1686 = vpack.c.bf16 %v1558, %v1556
  %v1687 = vpack.c.bf16 %v1559, %v1557
  %1688 = vset.pattern.permute.xlu0 1
  %1689 = vperm.xlu0 %1688, %v70
  %v1690 = vpop.permute.xlu0 %1689
  %1692 = vset.pattern.permute.xlu0 1
  %1693 = vperm.xlu0 %1692, %v71
  %v1694 = vpop.permute.xlu0 %1693
  %1696 = vset.pattern.permute.xlu0 1
  %1697 = vperm.xlu0 %1696, %v72
  %v1698 = vpop.permute.xlu0 %1697
  %1700 = vset.pattern.permute.xlu0 1
  %1701 = vperm.xlu0 %1700, %v73
  %v1702 = vpop.permute.xlu0 %1701
  %1704 = vset.pattern.permute.xlu0 1
  %1705 = vperm.xlu0 %1704, %v74
  %v1706 = vpop.permute.xlu0 %1705
  %1708 = vset.pattern.permute.xlu0 1
  %1709 = vperm.xlu0 %1708, %v75
  %v1710 = vpop.permute.xlu0 %1709
  %1712 = vset.pattern.permute.xlu0 1
  %1713 = vperm.xlu0 %1712, %v76
  %v1714 = vpop.permute.xlu0 %1713
  %1716 = vset.pattern.permute.xlu0 1
  %1717 = vperm.xlu0 %1716, %v77
  %v1718 = vpop.permute.xlu0 %1717
  %1720 = vset.pattern.permute.xlu0 1
  %1721 = vperm.xlu0 %1720, %v78
  %v1722 = vpop.permute.xlu0 %1721
  %1724 = vset.pattern.permute.xlu0 1
  %1725 = vperm.xlu0 %1724, %v79
  %v1726 = vpop.permute.xlu0 %1725
  %1728 = vset.pattern.permute.xlu0 1
  %1729 = vperm.xlu0 %1728, %v80
  %v1730 = vpop.permute.xlu0 %1729
  %1732 = vset.pattern.permute.xlu0 1
  %1733 = vperm.xlu0 %1732, %v81
  %v1734 = vpop.permute.xlu0 %1733
  %1736 = vset.pattern.permute.xlu0 1
  %1737 = vperm.xlu0 %1736, %v82
  %v1738 = vpop.permute.xlu0 %1737
  %1740 = vset.pattern.permute.xlu0 1
  %1741 = vperm.xlu0 %1740, %v83
  %v1742 = vpop.permute.xlu0 %1741
  %1744 = vset.pattern.permute.xlu0 1
  %1745 = vperm.xlu0 %1744, %v84
  %v1746 = vpop.permute.xlu0 %1745
  %1748 = vset.pattern.permute.xlu0 1
  %1749 = vperm.xlu0 %1748, %v85
  %v1750 = vpop.permute.xlu0 %1749
  %1752 = vset.pattern.permute.xlu0 1
  %1753 = vperm.xlu0 %1752, %v86
  %v1754 = vpop.permute.xlu0 %1753
  %1756 = vset.pattern.permute.xlu0 1
  %1757 = vperm.xlu0 %1756, %v87
  %v1758 = vpop.permute.xlu0 %1757
  %1760 = vset.pattern.permute.xlu0 1
  %1761 = vperm.xlu0 %1760, %v88
  %v1762 = vpop.permute.xlu0 %1761
  %1764 = vset.pattern.permute.xlu0 1
  %1765 = vperm.xlu0 %1764, %v89
  %v1766 = vpop.permute.xlu0 %1765
  %1768 = vset.pattern.permute.xlu0 1
  %1769 = vperm.xlu0 %1768, %v90
  %v1770 = vpop.permute.xlu0 %1769
  %1772 = vset.pattern.permute.xlu0 1
  %1773 = vperm.xlu0 %1772, %v91
  %v1774 = vpop.permute.xlu0 %1773
  %1776 = vset.pattern.permute.xlu0 1
  %1777 = vperm.xlu0 %1776, %v92
  %v1778 = vpop.permute.xlu0 %1777
  %1780 = vset.pattern.permute.xlu0 1
  %1781 = vperm.xlu0 %1780, %v93
  %v1782 = vpop.permute.xlu0 %1781
  %1784 = vset.pattern.permute.xlu0 1
  %1785 = vperm.xlu0 %1784, %v94
  %v1786 = vpop.permute.xlu0 %1785
  %1788 = vset.pattern.permute.xlu0 1
  %1789 = vperm.xlu0 %1788, %v95
  %v1790 = vpop.permute.xlu0 %1789
  %1792 = vset.pattern.permute.xlu0 1
  %1793 = vperm.xlu0 %1792, %v96
  %v1794 = vpop.permute.xlu0 %1793
  %1796 = vset.pattern.permute.xlu0 1
  %1797 = vperm.xlu0 %1796, %v97
  %v1798 = vpop.permute.xlu0 %1797
  %1800 = vset.pattern.permute.xlu0 1
  %1801 = vperm.xlu0 %1800, %v98
  %v1802 = vpop.permute.xlu0 %1801
  %1804 = vset.pattern.permute.xlu0 1
  %1805 = vperm.xlu0 %1804, %v99
  %v1806 = vpop.permute.xlu0 %1805
  %1808 = vset.pattern.permute.xlu0 1
  %1809 = vperm.xlu0 %1808, %v100
  %v1810 = vpop.permute.xlu0 %1809
  %1812 = vset.pattern.permute.xlu0 1
  %1813 = vperm.xlu0 %1812, %v101
  %v1814 = vpop.permute.xlu0 %1813
  %v1880 = vunpack.c.l.b16 %v1560
  %v1881 = vunpack.c.h.b16 %v1560
  %v1882 = vunpack.c.l.b16 %v1561
  %v1883 = vunpack.c.h.b16 %v1561
  %v1884 = vunpack.c.l.b16 %v1562
  %v1885 = vunpack.c.h.b16 %v1562
  %v1886 = vunpack.c.l.b16 %v1563
  %v1887 = vunpack.c.h.b16 %v1563
  %v1888 = vunpack.c.l.b16 %v1564
  %v1889 = vunpack.c.h.b16 %v1564
  %v1890 = vunpack.c.l.b16 %v1565
  %v1891 = vunpack.c.h.b16 %v1565
  %v1892 = vunpack.c.l.b16 %v1566
  %v1893 = vunpack.c.h.b16 %v1566
  %v1894 = vunpack.c.l.b16 %v1567
  %v1895 = vunpack.c.h.b16 %v1567
  %v1896 = vunpack.c.l.b16 %v1568
  %v1897 = vunpack.c.h.b16 %v1568
  %v1898 = vunpack.c.l.b16 %v1569
  %v1899 = vunpack.c.h.b16 %v1569
  %v1900 = vunpack.c.l.b16 %v1570
  %v1901 = vunpack.c.h.b16 %v1570
  %v1902 = vunpack.c.l.b16 %v1571
  %v1903 = vunpack.c.h.b16 %v1571
  %v1904 = vunpack.c.l.b16 %v1572
  %v1905 = vunpack.c.h.b16 %v1572
  %v1906 = vunpack.c.l.b16 %v1573
  %v1907 = vunpack.c.h.b16 %v1573
  %v1908 = vunpack.c.l.b16 %v1574
  %v1909 = vunpack.c.h.b16 %v1574
  %v1910 = vunpack.c.l.b16 %v1575
  %v1911 = vunpack.c.h.b16 %v1575
  %v1912 = vunpack.c.l.b16 %v1576
  %v1913 = vunpack.c.h.b16 %v1576
  %v1914 = vunpack.c.l.b16 %v1577
  %v1915 = vunpack.c.h.b16 %v1577
  %v1916 = vunpack.c.l.b16 %v1578
  %v1917 = vunpack.c.h.b16 %v1578
  %v1918 = vunpack.c.l.b16 %v1579
  %v1919 = vunpack.c.h.b16 %v1579
  %v1920 = vunpack.c.l.b16 %v1580
  %v1921 = vunpack.c.h.b16 %v1580
  %v1922 = vunpack.c.l.b16 %v1581
  %v1923 = vunpack.c.h.b16 %v1581
  %v1924 = vunpack.c.l.b16 %v1582
  %v1925 = vunpack.c.h.b16 %v1582
  %v1926 = vunpack.c.l.b16 %v1583
  %v1927 = vunpack.c.h.b16 %v1583
  %v1928 = vunpack.c.l.b16 %v1584
  %v1929 = vunpack.c.h.b16 %v1584
  %v1930 = vunpack.c.l.b16 %v1585
  %v1931 = vunpack.c.h.b16 %v1585
  %v1932 = vunpack.c.l.b16 %v1586
  %v1933 = vunpack.c.h.b16 %v1586
  %v1934 = vunpack.c.l.b16 %v1587
  %v1935 = vunpack.c.h.b16 %v1587
  %v1936 = vunpack.c.l.b16 %v1588
  %v1937 = vunpack.c.h.b16 %v1588
  %v1938 = vunpack.c.l.b16 %v1589
  %v1939 = vunpack.c.h.b16 %v1589
  %v1940 = vunpack.c.l.b16 %v1590
  %v1941 = vunpack.c.h.b16 %v1590
  %v1942 = vunpack.c.l.b16 %v1591
  %v1943 = vunpack.c.h.b16 %v1591
  %v1944 = vunpack.c.l.b16 %v1592
  %v1945 = vunpack.c.h.b16 %v1592
  %v1946 = vunpack.c.l.b16 %v1593
  %v1947 = vunpack.c.h.b16 %v1593
  %v1948 = vunpack.c.l.b16 %v1594
  %v1949 = vunpack.c.h.b16 %v1594
  %v1950 = vunpack.c.l.b16 %v1595
  %v1951 = vunpack.c.h.b16 %v1595
  %v1952 = vunpack.c.l.b16 %v1596
  %v1953 = vunpack.c.h.b16 %v1596
  %v1954 = vunpack.c.l.b16 %v1597
  %v1955 = vunpack.c.h.b16 %v1597
  %v1956 = vunpack.c.l.b16 %v1598
  %v1957 = vunpack.c.h.b16 %v1598
  %v1958 = vunpack.c.l.b16 %v1599
  %v1959 = vunpack.c.h.b16 %v1599
  %v1960 = vunpack.c.l.b16 %v1600
  %v1961 = vunpack.c.h.b16 %v1600
  %v1962 = vunpack.c.l.b16 %v1601
  %v1963 = vunpack.c.h.b16 %v1601
  %v1964 = vunpack.c.l.b16 %v1602
  %v1965 = vunpack.c.h.b16 %v1602
  %v1966 = vunpack.c.l.b16 %v1603
  %v1967 = vunpack.c.h.b16 %v1603
  %v1968 = vunpack.c.l.b16 %v1604
  %v1969 = vunpack.c.h.b16 %v1604
  %v1970 = vunpack.c.l.b16 %v1605
  %v1971 = vunpack.c.h.b16 %v1605
  %v1972 = vunpack.c.l.b16 %v1606
  %v1973 = vunpack.c.h.b16 %v1606
  %v1974 = vunpack.c.l.b16 %v1607
  %v1975 = vunpack.c.h.b16 %v1607
  %v1976 = vunpack.c.l.b16 %v1608
  %v1977 = vunpack.c.h.b16 %v1608
  %v1978 = vunpack.c.l.b16 %v1609
  %v1979 = vunpack.c.h.b16 %v1609
  %v1980 = vunpack.c.l.b16 %v1610
  %v1981 = vunpack.c.h.b16 %v1610
  %v1982 = vunpack.c.l.b16 %v1611
  %v1983 = vunpack.c.h.b16 %v1611
  %v1984 = vunpack.c.l.b16 %v1612
  %v1985 = vunpack.c.h.b16 %v1612
  %v1986 = vunpack.c.l.b16 %v1613
  %v1987 = vunpack.c.h.b16 %v1613
  %v1988 = vunpack.c.l.b16 %v1614
  %v1989 = vunpack.c.h.b16 %v1614
  %v1990 = vunpack.c.l.b16 %v1615
  %v1991 = vunpack.c.h.b16 %v1615
  %v1992 = vunpack.c.l.b16 %v1616
  %v1993 = vunpack.c.h.b16 %v1616
  %v1994 = vunpack.c.l.b16 %v1617
  %v1995 = vunpack.c.h.b16 %v1617
  %v1996 = vunpack.c.l.b16 %v1618
  %v1997 = vunpack.c.h.b16 %v1618
  %v1998 = vunpack.c.l.b16 %v1619
  %v1999 = vunpack.c.h.b16 %v1619
  %v2000 = vunpack.c.l.b16 %v1620
  %v2001 = vunpack.c.h.b16 %v1620
  %v2002 = vunpack.c.l.b16 %v1621
  %v2003 = vunpack.c.h.b16 %v1621
  %v2004 = vunpack.c.l.b16 %v1622
  %v2005 = vunpack.c.h.b16 %v1622
  %v2006 = vunpack.c.l.b16 %v1623
  %v2007 = vunpack.c.h.b16 %v1623
  %v2008 = vpack.c.b16 %v1884, %v1880
  %v2009 = vpack.c.b16 %v1885, %v1881
  %v2010 = vpack.c.b16 %v1886, %v1882
  %v2011 = vpack.c.b16 %v1887, %v1883
  %v2012 = vpack.c.b16 %v1892, %v1888
  %v2013 = vpack.c.b16 %v1893, %v1889
  %v2014 = vpack.c.b16 %v1894, %v1890
  %v2015 = vpack.c.b16 %v1895, %v1891
  %v2016 = vpack.c.b16 %v1900, %v1896
  %v2017 = vpack.c.b16 %v1901, %v1897
  %v2018 = vpack.c.b16 %v1902, %v1898
  %v2019 = vpack.c.b16 %v1903, %v1899
  %v2020 = vpack.c.b16 %v1908, %v1904
  %v2021 = vpack.c.b16 %v1909, %v1905
  %v2022 = vpack.c.b16 %v1910, %v1906
  %v2023 = vpack.c.b16 %v1911, %v1907
  %v2024 = vpack.c.b16 %v1916, %v1912
  %v2025 = vpack.c.b16 %v1917, %v1913
  %v2026 = vpack.c.b16 %v1918, %v1914
  %v2027 = vpack.c.b16 %v1919, %v1915
  %v2028 = vpack.c.b16 %v1924, %v1920
  %v2029 = vpack.c.b16 %v1925, %v1921
  %v2030 = vpack.c.b16 %v1926, %v1922
  %v2031 = vpack.c.b16 %v1927, %v1923
  %v2032 = vpack.c.b16 %v1932, %v1928
  %v2033 = vpack.c.b16 %v1933, %v1929
  %v2034 = vpack.c.b16 %v1934, %v1930
  %v2035 = vpack.c.b16 %v1935, %v1931
  %v2036 = vpack.c.b16 %v1940, %v1936
  %v2037 = vpack.c.b16 %v1941, %v1937
  %v2038 = vpack.c.b16 %v1942, %v1938
  %v2039 = vpack.c.b16 %v1943, %v1939
  %v2040 = vpack.c.b16 %v1948, %v1944
  %v2041 = vpack.c.b16 %v1949, %v1945
  %v2042 = vpack.c.b16 %v1950, %v1946
  %v2043 = vpack.c.b16 %v1951, %v1947
  %v2044 = vpack.c.b16 %v1956, %v1952
  %v2045 = vpack.c.b16 %v1957, %v1953
  %v2046 = vpack.c.b16 %v1958, %v1954
  %v2047 = vpack.c.b16 %v1959, %v1955
  %v2048 = vpack.c.b16 %v1964, %v1960
  %v2049 = vpack.c.b16 %v1965, %v1961
  %v2050 = vpack.c.b16 %v1966, %v1962
  %v2051 = vpack.c.b16 %v1967, %v1963
  %v2052 = vpack.c.b16 %v1972, %v1968
  %v2053 = vpack.c.b16 %v1973, %v1969
  %v2054 = vpack.c.b16 %v1974, %v1970
  %v2055 = vpack.c.b16 %v1975, %v1971
  %v2056 = vpack.c.b16 %v1980, %v1976
  %v2057 = vpack.c.b16 %v1981, %v1977
  %v2058 = vpack.c.b16 %v1982, %v1978
  %v2059 = vpack.c.b16 %v1983, %v1979
  %v2060 = vpack.c.b16 %v1988, %v1984
  %v2061 = vpack.c.b16 %v1989, %v1985
  %v2062 = vpack.c.b16 %v1990, %v1986
  %v2063 = vpack.c.b16 %v1991, %v1987
  %v2064 = vpack.c.b16 %v1996, %v1992
  %v2065 = vpack.c.b16 %v1997, %v1993
  %v2066 = vpack.c.b16 %v1998, %v1994
  %v2067 = vpack.c.b16 %v1999, %v1995
  %v2068 = vpack.c.b16 %v2004, %v2000
  %v2069 = vpack.c.b16 %v2005, %v2001
  %v2070 = vpack.c.b16 %v2006, %v2002
  %v2071 = vpack.c.b16 %v2007, %v2003
  %2136 = vmatprep.subr.bf16.mxu0 %v1625
  %2137 = vmatpush1.bf16.msra.mxu0 %v1624
  %2138 = vmatprep.subr.bf16.mxu0 %v1627
  %2139 = vmatpush1.bf16.msra.mxu0 %v1626
  %2140 = vmatprep.subr.bf16.mxu0 %v1629
  %2141 = vmatpush1.bf16.msra.mxu0 %v1628
  %2142 = vmatprep.subr.bf16.mxu0 %v1631
  %2143 = vmatpush1.bf16.msra.mxu0 %v1630
  %2144 = vmatprep.subr.bf16.mxu0 %v1633
  %2145 = vmatpush1.bf16.msra.mxu0 %v1632
  %2146 = vmatprep.subr.bf16.mxu0 %v1635
  %2147 = vmatpush1.bf16.msra.mxu0 %v1634
  %2148 = vmatprep.subr.bf16.mxu0 %v1637
  %2149 = vmatpush1.bf16.msra.mxu0 %v1636
  %2150 = vmatprep.subr.bf16.mxu0 %v1639
  %2151 = vmatpush1.bf16.msra.mxu0 %v1638
  %2152 = vmatprep.subr.bf16.mxu0 %v1641
  %2153 = vmatpush1.bf16.msra.mxu0 %v1640
  %2154 = vmatprep.subr.bf16.mxu0 %v1643
  %2155 = vmatpush1.bf16.msra.mxu0 %v1642
  %2156 = vmatprep.subr.bf16.mxu0 %v1645
  %2157 = vmatpush1.bf16.msra.mxu0 %v1644
  %2158 = vmatprep.subr.bf16.mxu0 %v1647
  %2159 = vmatpush1.bf16.msra.mxu0 %v1646
  %2160 = vmatprep.subr.bf16.mxu0 %v1649
  %2161 = vmatpush1.bf16.msra.mxu0 %v1648
  %2162 = vmatprep.subr.bf16.mxu0 %v1651
  %2163 = vmatpush1.bf16.msra.mxu0 %v1650
  %2164 = vmatprep.subr.bf16.mxu0 %v1653
  %2165 = vmatpush1.bf16.msra.mxu0 %v1652
  %2166 = vmatprep.subr.bf16.mxu0 %v1655
  %2167 = vmatpush1.bf16.msra.mxu0 %v1654
  %2168 = vmatprep.mubr.bf16.mxu0 %v2009
  %2169 = vmatmul.mubr.bf16.gmra.mrb[0].mxu0 %v2008
  %v2170 = vpop.f32.mrb[0].mxu0
  %v2171 = vadd.f32 %v1690, %v2170
  %v2172 = vpop.f32.mrb[0].mxu0
  %v2173 = vadd.f32 %v1690, %v2172
  %v2174 = vpop.f32.mrb[0].mxu0
  %v2175 = vadd.f32 %v1694, %v2174
  %v2176 = vpop.f32.mrb[0].mxu0
  %v2177 = vadd.f32 %v1694, %v2176
  %2178 = vmatprep.mubr.bf16.mxu0 %v2013
  %2179 = vmatmul.mubr.bf16.gmra.mrb[0].mxu0 %v2012
  %v2180 = vpop.f32.mrb[0].mxu0
  %v2181 = vadd.f32 %v1698, %v2180
  %v2182 = vpop.f32.mrb[0].mxu0
  %v2183 = vadd.f32 %v1698, %v2182
  %v2184 = vpop.f32.mrb[0].mxu0
  %v2185 = vadd.f32 %v1702, %v2184
  %v2186 = vpop.f32.mrb[0].mxu0
  %v2187 = vadd.f32 %v1702, %v2186
  %2188 = vmatprep.mubr.bf16.mxu0 %v2017
  %2189 = vmatmul.mubr.bf16.gmra.mrb[0].mxu0 %v2016
  %v2190 = vpop.f32.mrb[0].mxu0
  %v2191 = vadd.f32 %v1706, %v2190
  %v2192 = vpop.f32.mrb[0].mxu0
  %v2193 = vadd.f32 %v1706, %v2192
  %v2194 = vpop.f32.mrb[0].mxu0
  %v2195 = vadd.f32 %v1710, %v2194
  %v2196 = vpop.f32.mrb[0].mxu0
  %v2197 = vadd.f32 %v1710, %v2196
  %2198 = vmatprep.mubr.bf16.mxu0 %v2021
  %2199 = vmatmul.mubr.bf16.gmra.mrb[0].mxu0 %v2020
  %v2200 = vpop.f32.mrb[0].mxu0
  %v2201 = vadd.f32 %v1714, %v2200
  %v2202 = vpop.f32.mrb[0].mxu0
  %v2203 = vadd.f32 %v1714, %v2202
  %v2204 = vpop.f32.mrb[0].mxu0
  %v2205 = vadd.f32 %v1718, %v2204
  %v2206 = vpop.f32.mrb[0].mxu0
  %v2207 = vadd.f32 %v1718, %v2206
  %2208 = vmatprep.mubr.bf16.mxu0 %v2025
  %2209 = vmatmul.mubr.bf16.gmra.mrb[0].mxu0 %v2024
  %v2210 = vpop.f32.mrb[0].mxu0
  %v2211 = vadd.f32 %v1722, %v2210
  %v2212 = vpop.f32.mrb[0].mxu0
  %v2213 = vadd.f32 %v1722, %v2212
  %v2214 = vpop.f32.mrb[0].mxu0
  %v2215 = vadd.f32 %v1726, %v2214
  %v2216 = vpop.f32.mrb[0].mxu0
  %v2217 = vadd.f32 %v1726, %v2216
  %2218 = vmatprep.mubr.bf16.mxu0 %v2029
  %2219 = vmatmul.mubr.bf16.gmra.mrb[0].mxu0 %v2028
  %v2220 = vpop.f32.mrb[0].mxu0
  %v2221 = vadd.f32 %v1730, %v2220
  %v2222 = vpop.f32.mrb[0].mxu0
  %v2223 = vadd.f32 %v1730, %v2222
  %v2224 = vpop.f32.mrb[0].mxu0
  %v2225 = vadd.f32 %v1734, %v2224
  %v2226 = vpop.f32.mrb[0].mxu0
  %v2227 = vadd.f32 %v1734, %v2226
  %2228 = vmatprep.mubr.bf16.mxu0 %v2033
  %2229 = vmatmul.mubr.bf16.gmra.mrb[0].mxu0 %v2032
  %v2230 = vpop.f32.mrb[0].mxu0
  %v2231 = vadd.f32 %v1738, %v2230
  %v2232 = vpop.f32.mrb[0].mxu0
  %v2233 = vadd.f32 %v1738, %v2232
  %v2234 = vpop.f32.mrb[0].mxu0
  %v2235 = vadd.f32 %v1742, %v2234
  %v2236 = vpop.f32.mrb[0].mxu0
  %v2237 = vadd.f32 %v1742, %v2236
  %2238 = vmatprep.mubr.bf16.mxu0 %v2037
  %2239 = vmatmul.mubr.bf16.gmra.mrb[0].mxu0 %v2036
  %v2240 = vpop.f32.mrb[0].mxu0
  %v2241 = vadd.f32 %v1746, %v2240
  %v2242 = vpop.f32.mrb[0].mxu0
  %v2243 = vadd.f32 %v1746, %v2242
  %v2244 = vpop.f32.mrb[0].mxu0
  %v2245 = vadd.f32 %v1750, %v2244
  %v2246 = vpop.f32.mrb[0].mxu0
  %v2247 = vadd.f32 %v1750, %v2246
  %2248 = vmatprep.mubr.bf16.mxu0 %v2041
  %2249 = vmatmul.mubr.bf16.gmra.mrb[0].mxu0 %v2040
  %v2250 = vpop.f32.mrb[0].mxu0
  %v2251 = vadd.f32 %v1754, %v2250
  %v2252 = vpop.f32.mrb[0].mxu0
  %v2253 = vadd.f32 %v1754, %v2252
  %v2254 = vpop.f32.mrb[0].mxu0
  %v2255 = vadd.f32 %v1758, %v2254
  %v2256 = vpop.f32.mrb[0].mxu0
  %v2257 = vadd.f32 %v1758, %v2256
  %2258 = vmatprep.mubr.bf16.mxu0 %v2045
  %2259 = vmatmul.mubr.bf16.gmra.mrb[0].mxu0 %v2044
  %v2260 = vpop.f32.mrb[0].mxu0
  %v2261 = vadd.f32 %v1762, %v2260
  %v2262 = vpop.f32.mrb[0].mxu0
  %v2263 = vadd.f32 %v1762, %v2262
  %v2264 = vpop.f32.mrb[0].mxu0
  %v2265 = vadd.f32 %v1766, %v2264
  %v2266 = vpop.f32.mrb[0].mxu0
  %v2267 = vadd.f32 %v1766, %v2266
  %2268 = vmatprep.mubr.bf16.mxu0 %v2049
  %2269 = vmatmul.mubr.bf16.gmra.mrb[0].mxu0 %v2048
  %v2270 = vpop.f32.mrb[0].mxu0
  %v2271 = vadd.f32 %v1770, %v2270
  %v2272 = vpop.f32.mrb[0].mxu0
  %v2273 = vadd.f32 %v1770, %v2272
  %v2274 = vpop.f32.mrb[0].mxu0
  %v2275 = vadd.f32 %v1774, %v2274
  %v2276 = vpop.f32.mrb[0].mxu0
  %v2277 = vadd.f32 %v1774, %v2276
  %2278 = vmatprep.mubr.bf16.mxu0 %v2053
  %2279 = vmatmul.mubr.bf16.gmra.mrb[0].mxu0 %v2052
  %v2280 = vpop.f32.mrb[0].mxu0
  %v2281 = vadd.f32 %v1778, %v2280
  %v2282 = vpop.f32.mrb[0].mxu0
  %v2283 = vadd.f32 %v1778, %v2282
  %v2284 = vpop.f32.mrb[0].mxu0
  %v2285 = vadd.f32 %v1782, %v2284
  %v2286 = vpop.f32.mrb[0].mxu0
  %v2287 = vadd.f32 %v1782, %v2286
  %2288 = vmatprep.mubr.bf16.mxu0 %v2057
  %2289 = vmatmul.mubr.bf16.gmra.mrb[0].mxu0 %v2056
  %v2290 = vpop.f32.mrb[0].mxu0
  %v2291 = vadd.f32 %v1786, %v2290
  %v2292 = vpop.f32.mrb[0].mxu0
  %v2293 = vadd.f32 %v1786, %v2292
  %v2294 = vpop.f32.mrb[0].mxu0
  %v2295 = vadd.f32 %v1790, %v2294
  %v2296 = vpop.f32.mrb[0].mxu0
  %v2297 = vadd.f32 %v1790, %v2296
  %2298 = vmatprep.mubr.bf16.mxu0 %v2061
  %2299 = vmatmul.mubr.bf16.gmra.mrb[0].mxu0 %v2060
  %v2300 = vpop.f32.mrb[0].mxu0
  %v2301 = vadd.f32 %v1794, %v2300
  %v2302 = vpop.f32.mrb[0].mxu0
  %v2303 = vadd.f32 %v1794, %v2302
  %v2304 = vpop.f32.mrb[0].mxu0
  %v2305 = vadd.f32 %v1798, %v2304
  %v2306 = vpop.f32.mrb[0].mxu0
  %v2307 = vadd.f32 %v1798, %v2306
  %2308 = vmatprep.mubr.bf16.mxu0 %v2065
  %2309 = vmatmul.mubr.bf16.gmra.mrb[0].mxu0 %v2064
  %v2310 = vpop.f32.mrb[0].mxu0
  %v2311 = vadd.f32 %v1802, %v2310
  %v2312 = vpop.f32.mrb[0].mxu0
  %v2313 = vadd.f32 %v1802, %v2312
  %v2314 = vpop.f32.mrb[0].mxu0
  %v2315 = vadd.f32 %v1806, %v2314
  %v2316 = vpop.f32.mrb[0].mxu0
  %v2317 = vadd.f32 %v1806, %v2316
  %2318 = vmatprep.mubr.bf16.mxu0 %v2069
  %2319 = vmatmul.mubr.bf16.gmra.mrb[0].mxu0 %v2068
  %v2320 = vpop.f32.mrb[0].mxu0
  %v2321 = vadd.f32 %v1810, %v2320
  %v2322 = vpop.f32.mrb[0].mxu0
  %v2323 = vadd.f32 %v1810, %v2322
  %v2324 = vpop.f32.mrb[0].mxu0
  %v2325 = vadd.f32 %v1814, %v2324
  %v2326 = vpop.f32.mrb[0].mxu0
  %v2327 = vadd.f32 %v1814, %v2326
  %2328 = vdwg.mxu0
  %2329 = vmatprep.subr.bf16.mxu0 %v1657
  %2330 = vmatpush1.bf16.msra.mxu0 %v1656
  %2331 = vmatprep.subr.bf16.mxu0 %v1659
  %2332 = vmatpush1.bf16.msra.mxu0 %v1658
  %2333 = vmatprep.subr.bf16.mxu0 %v1661
  %2334 = vmatpush1.bf16.msra.mxu0 %v1660
  %2335 = vmatprep.subr.bf16.mxu0 %v1663
  %2336 = vmatpush1.bf16.msra.mxu0 %v1662
  %2337 = vmatprep.subr.bf16.mxu0 %v1665
  %2338 = vmatpush1.bf16.msra.mxu0 %v1664
  %2339 = vmatprep.subr.bf16.mxu0 %v1667
  %2340 = vmatpush1.bf16.msra.mxu0 %v1666
  %2341 = vmatprep.subr.bf16.mxu0 %v1669
  %2342 = vmatpush1.bf16.msra.mxu0 %v1668
  %2343 = vmatprep.subr.bf16.mxu0 %v1671
  %2344 = vmatpush1.bf16.msra.mxu0 %v1670
  %2345 = vmatprep.subr.bf16.mxu0 %v1673
  %2346 = vmatpush1.bf16.msra.mxu0 %v1672
  %2347 = vmatprep.subr.bf16.mxu0 %v1675
  %2348 = vmatpush1.bf16.msra.mxu0 %v1674
  %2349 = vmatprep.subr.bf16.mxu0 %v1677
  %2350 = vmatpush1.bf16.msra.mxu0 %v1676
  %2351 = vmatprep.subr.bf16.mxu0 %v1679
  %2352 = vmatpush1.bf16.msra.mxu0 %v1678
  %2353 = vmatprep.subr.bf16.mxu0 %v1681
  %2354 = vmatpush1.bf16.msra.mxu0 %v1680
  %2355 = vmatprep.subr.bf16.mxu0 %v1683
  %2356 = vmatpush1.bf16.msra.mxu0 %v1682
  %2357 = vmatprep.subr.bf16.mxu0 %v1685
  %2358 = vmatpush1.bf16.msra.mxu0 %v1684
  %2359 = vmatprep.subr.bf16.mxu0 %v1687
  %2360 = vmatpush1.bf16.msra.mxu0 %v1686
  %2361 = vmatprep.mubr.bf16.mxu0 %v2011
  %2362 = vmatmul.mubr.bf16.gmra.mrb[0].mxu0 %v2010
  %v2363 = vpop.f32.mrb[0].mxu0
  %v2364 = vadd.f32 %v2171, %v2363
  %v2365 = vpop.f32.mrb[0].mxu0
  %v2366 = vadd.f32 %v2173, %v2365
  %v2367 = vpop.f32.mrb[0].mxu0
  %v2368 = vadd.f32 %v2175, %v2367
  %v2369 = vpop.f32.mrb[0].mxu0
  %v2370 = vadd.f32 %v2177, %v2369
  %2371 = vmatprep.mubr.bf16.mxu0 %v2015
  %2372 = vmatmul.mubr.bf16.gmra.mrb[0].mxu0 %v2014
  %v2373 = vpop.f32.mrb[0].mxu0
  %v2374 = vadd.f32 %v2181, %v2373
  %v2375 = vpop.f32.mrb[0].mxu0
  %v2376 = vadd.f32 %v2183, %v2375
  %v2377 = vpop.f32.mrb[0].mxu0
  %v2378 = vadd.f32 %v2185, %v2377
  %v2379 = vpop.f32.mrb[0].mxu0
  %v2380 = vadd.f32 %v2187, %v2379
  %2381 = vmatprep.mubr.bf16.mxu0 %v2019
  %2382 = vmatmul.mubr.bf16.gmra.mrb[0].mxu0 %v2018
  %v2383 = vpop.f32.mrb[0].mxu0
  %v2384 = vadd.f32 %v2191, %v2383
  %v2385 = vpop.f32.mrb[0].mxu0
  %v2386 = vadd.f32 %v2193, %v2385
  %v2387 = vpop.f32.mrb[0].mxu0
  %v2388 = vadd.f32 %v2195, %v2387
  %v2389 = vpop.f32.mrb[0].mxu0
  %v2390 = vadd.f32 %v2197, %v2389
  %2391 = vmatprep.mubr.bf16.mxu0 %v2023
  %2392 = vmatmul.mubr.bf16.gmra.mrb[0].mxu0 %v2022
  %v2393 = vpop.f32.mrb[0].mxu0
  %v2394 = vadd.f32 %v2201, %v2393
  %v2395 = vpop.f32.mrb[0].mxu0
  %v2396 = vadd.f32 %v2203, %v2395
  %v2397 = vpop.f32.mrb[0].mxu0
  %v2398 = vadd.f32 %v2205, %v2397
  %v2399 = vpop.f32.mrb[0].mxu0
  %v2400 = vadd.f32 %v2207, %v2399
  %2401 = vmatprep.mubr.bf16.mxu0 %v2027
  %2402 = vmatmul.mubr.bf16.gmra.mrb[0].mxu0 %v2026
  %v2403 = vpop.f32.mrb[0].mxu0
  %v2404 = vadd.f32 %v2211, %v2403
  %v2405 = vpop.f32.mrb[0].mxu0
  %v2406 = vadd.f32 %v2213, %v2405
  %v2407 = vpop.f32.mrb[0].mxu0
  %v2408 = vadd.f32 %v2215, %v2407
  %v2409 = vpop.f32.mrb[0].mxu0
  %v2410 = vadd.f32 %v2217, %v2409
  %2411 = vmatprep.mubr.bf16.mxu0 %v2031
  %2412 = vmatmul.mubr.bf16.gmra.mrb[0].mxu0 %v2030
  %v2413 = vpop.f32.mrb[0].mxu0
  %v2414 = vadd.f32 %v2221, %v2413
  %v2415 = vpop.f32.mrb[0].mxu0
  %v2416 = vadd.f32 %v2223, %v2415
  %v2417 = vpop.f32.mrb[0].mxu0
  %v2418 = vadd.f32 %v2225, %v2417
  %v2419 = vpop.f32.mrb[0].mxu0
  %v2420 = vadd.f32 %v2227, %v2419
  %2421 = vmatprep.mubr.bf16.mxu0 %v2035
  %2422 = vmatmul.mubr.bf16.gmra.mrb[0].mxu0 %v2034
  %v2423 = vpop.f32.mrb[0].mxu0
  %v2424 = vadd.f32 %v2231, %v2423
  %v2425 = vpop.f32.mrb[0].mxu0
  %v2426 = vadd.f32 %v2233, %v2425
  %v2427 = vpop.f32.mrb[0].mxu0
  %v2428 = vadd.f32 %v2235, %v2427
  %v2429 = vpop.f32.mrb[0].mxu0
  %v2430 = vadd.f32 %v2237, %v2429
  %2431 = vmatprep.mubr.bf16.mxu0 %v2039
  %2432 = vmatmul.mubr.bf16.gmra.mrb[0].mxu0 %v2038
  %v2433 = vpop.f32.mrb[0].mxu0
  %v2434 = vadd.f32 %v2241, %v2433
  %v2435 = vpop.f32.mrb[0].mxu0
  %v2436 = vadd.f32 %v2243, %v2435
  %v2437 = vpop.f32.mrb[0].mxu0
  %v2438 = vadd.f32 %v2245, %v2437
  %v2439 = vpop.f32.mrb[0].mxu0
  %v2440 = vadd.f32 %v2247, %v2439
  %2441 = vmatprep.mubr.bf16.mxu0 %v2043
  %2442 = vmatmul.mubr.bf16.gmra.mrb[0].mxu0 %v2042
  %v2443 = vpop.f32.mrb[0].mxu0
  %v2444 = vadd.f32 %v2251, %v2443
  %v2445 = vpop.f32.mrb[0].mxu0
  %v2446 = vadd.f32 %v2253, %v2445
  %v2447 = vpop.f32.mrb[0].mxu0
  %v2448 = vadd.f32 %v2255, %v2447
  %v2449 = vpop.f32.mrb[0].mxu0
  %v2450 = vadd.f32 %v2257, %v2449
  %2451 = vmatprep.mubr.bf16.mxu0 %v2047
  %2452 = vmatmul.mubr.bf16.gmra.mrb[0].mxu0 %v2046
  %v2453 = vpop.f32.mrb[0].mxu0
  %v2454 = vadd.f32 %v2261, %v2453
  %v2455 = vpop.f32.mrb[0].mxu0
  %v2456 = vadd.f32 %v2263, %v2455
  %v2457 = vpop.f32.mrb[0].mxu0
  %v2458 = vadd.f32 %v2265, %v2457
  %v2459 = vpop.f32.mrb[0].mxu0
  %v2460 = vadd.f32 %v2267, %v2459
  %2461 = vmatprep.mubr.bf16.mxu0 %v2051
  %2462 = vmatmul.mubr.bf16.gmra.mrb[0].mxu0 %v2050
  %v2463 = vpop.f32.mrb[0].mxu0
  %v2464 = vadd.f32 %v2271, %v2463
  %v2465 = vpop.f32.mrb[0].mxu0
  %v2466 = vadd.f32 %v2273, %v2465
  %v2467 = vpop.f32.mrb[0].mxu0
  %v2468 = vadd.f32 %v2275, %v2467
  %v2469 = vpop.f32.mrb[0].mxu0
  %v2470 = vadd.f32 %v2277, %v2469
  %2471 = vmatprep.mubr.bf16.mxu0 %v2055
  %2472 = vmatmul.mubr.bf16.gmra.mrb[0].mxu0 %v2054
  %v2473 = vpop.f32.mrb[0].mxu0
  %v2474 = vadd.f32 %v2281, %v2473
  %v2475 = vpop.f32.mrb[0].mxu0
  %v2476 = vadd.f32 %v2283, %v2475
  %v2477 = vpop.f32.mrb[0].mxu0
  %v2478 = vadd.f32 %v2285, %v2477
  %v2479 = vpop.f32.mrb[0].mxu0
  %v2480 = vadd.f32 %v2287, %v2479
  %2481 = vmatprep.mubr.bf16.mxu0 %v2059
  %2482 = vmatmul.mubr.bf16.gmra.mrb[0].mxu0 %v2058
  %v2483 = vpop.f32.mrb[0].mxu0
  %v2484 = vadd.f32 %v2291, %v2483
  %v2485 = vpop.f32.mrb[0].mxu0
  %v2486 = vadd.f32 %v2293, %v2485
  %v2487 = vpop.f32.mrb[0].mxu0
  %v2488 = vadd.f32 %v2295, %v2487
  %v2489 = vpop.f32.mrb[0].mxu0
  %v2490 = vadd.f32 %v2297, %v2489
  %2491 = vmatprep.mubr.bf16.mxu0 %v2063
  %2492 = vmatmul.mubr.bf16.gmra.mrb[0].mxu0 %v2062
  %v2493 = vpop.f32.mrb[0].mxu0
  %v2494 = vadd.f32 %v2301, %v2493
  %v2495 = vpop.f32.mrb[0].mxu0
  %v2496 = vadd.f32 %v2303, %v2495
  %v2497 = vpop.f32.mrb[0].mxu0
  %v2498 = vadd.f32 %v2305, %v2497
  %v2499 = vpop.f32.mrb[0].mxu0
  %v2500 = vadd.f32 %v2307, %v2499
  %2501 = vmatprep.mubr.bf16.mxu0 %v2067
  %2502 = vmatmul.mubr.bf16.gmra.mrb[0].mxu0 %v2066
  %v2503 = vpop.f32.mrb[0].mxu0
  %v2504 = vadd.f32 %v2311, %v2503
  %v2505 = vpop.f32.mrb[0].mxu0
  %v2506 = vadd.f32 %v2313, %v2505
  %v2507 = vpop.f32.mrb[0].mxu0
  %v2508 = vadd.f32 %v2315, %v2507
  %v2509 = vpop.f32.mrb[0].mxu0
  %v2510 = vadd.f32 %v2317, %v2509
  %2511 = vmatprep.mubr.bf16.mxu0 %v2071
  %2512 = vmatmul.mubr.bf16.gmra.mrb[0].mxu0 %v2070
  %v2513 = vpop.f32.mrb[0].mxu0
  %v2514 = vadd.f32 %v2321, %v2513
  %v2515 = vpop.f32.mrb[0].mxu0
  %v2516 = vadd.f32 %v2323, %v2515
  %v2517 = vpop.f32.mrb[0].mxu0
  %v2518 = vadd.f32 %v2325, %v2517
  %v2519 = vpop.f32.mrb[0].mxu0
  %v2520 = vadd.f32 %v2327, %v2519
  %2521 = vdwg.mxu0
  %vm2522 = vcmp.gt.f32.partialorder %v2364, 0.0
  %vm2523 = vcmp.gt.f32.partialorder %v2366, 0.0
  %vm2524 = vcmp.gt.f32.partialorder %v2368, 0.0
  %vm2525 = vcmp.gt.f32.partialorder %v2370, 0.0
  %vm2526 = vcmp.gt.f32.partialorder %v2374, 0.0
  %vm2527 = vcmp.gt.f32.partialorder %v2376, 0.0
  %vm2528 = vcmp.gt.f32.partialorder %v2378, 0.0
  %vm2529 = vcmp.gt.f32.partialorder %v2380, 0.0
  %vm2530 = vcmp.gt.f32.partialorder %v2384, 0.0
  %vm2531 = vcmp.gt.f32.partialorder %v2386, 0.0
  %vm2532 = vcmp.gt.f32.partialorder %v2388, 0.0
  %vm2533 = vcmp.gt.f32.partialorder %v2390, 0.0
  %vm2534 = vcmp.gt.f32.partialorder %v2394, 0.0
  %vm2535 = vcmp.gt.f32.partialorder %v2396, 0.0
  %vm2536 = vcmp.gt.f32.partialorder %v2398, 0.0
  %vm2537 = vcmp.gt.f32.partialorder %v2400, 0.0
  %vm2538 = vcmp.gt.f32.partialorder %v2404, 0.0
  %vm2539 = vcmp.gt.f32.partialorder %v2406, 0.0
  %vm2540 = vcmp.gt.f32.partialorder %v2408, 0.0
  %vm2541 = vcmp.gt.f32.partialorder %v2410, 0.0
  %vm2542 = vcmp.gt.f32.partialorder %v2414, 0.0
  %vm2543 = vcmp.gt.f32.partialorder %v2416, 0.0
  %vm2544 = vcmp.gt.f32.partialorder %v2418, 0.0
  %vm2545 = vcmp.gt.f32.partialorder %v2420, 0.0
  %vm2546 = vcmp.gt.f32.partialorder %v2424, 0.0
  %vm2547 = vcmp.gt.f32.partialorder %v2426, 0.0
  %vm2548 = vcmp.gt.f32.partialorder %v2428, 0.0
  %vm2549 = vcmp.gt.f32.partialorder %v2430, 0.0
  %vm2550 = vcmp.gt.f32.partialorder %v2434, 0.0
  %vm2551 = vcmp.gt.f32.partialorder %v2436, 0.0
  %vm2552 = vcmp.gt.f32.partialorder %v2438, 0.0
  %vm2553 = vcmp.gt.f32.partialorder %v2440, 0.0
  %vm2554 = vcmp.gt.f32.partialorder %v2444, 0.0
  %vm2555 = vcmp.gt.f32.partialorder %v2446, 0.0
  %vm2556 = vcmp.gt.f32.partialorder %v2448, 0.0
  %vm2557 = vcmp.gt.f32.partialorder %v2450, 0.0
  %vm2558 = vcmp.gt.f32.partialorder %v2454, 0.0
  %vm2559 = vcmp.gt.f32.partialorder %v2456, 0.0
  %vm2560 = vcmp.gt.f32.partialorder %v2458, 0.0
  %vm2561 = vcmp.gt.f32.partialorder %v2460, 0.0
  %vm2562 = vcmp.gt.f32.partialorder %v2464, 0.0
  %vm2563 = vcmp.gt.f32.partialorder %v2466, 0.0
  %vm2564 = vcmp.gt.f32.partialorder %v2468, 0.0
  %vm2565 = vcmp.gt.f32.partialorder %v2470, 0.0
  %vm2566 = vcmp.gt.f32.partialorder %v2474, 0.0
  %vm2567 = vcmp.gt.f32.partialorder %v2476, 0.0
  %vm2568 = vcmp.gt.f32.partialorder %v2478, 0.0
  %vm2569 = vcmp.gt.f32.partialorder %v2480, 0.0
  %vm2570 = vcmp.gt.f32.partialorder %v2484, 0.0
  %vm2571 = vcmp.gt.f32.partialorder %v2486, 0.0
  %vm2572 = vcmp.gt.f32.partialorder %v2488, 0.0
  %vm2573 = vcmp.gt.f32.partialorder %v2490, 0.0
  %vm2574 = vcmp.gt.f32.partialorder %v2494, 0.0
  %vm2575 = vcmp.gt.f32.partialorder %v2496, 0.0
  %vm2576 = vcmp.gt.f32.partialorder %v2498, 0.0
  %vm2577 = vcmp.gt.f32.partialorder %v2500, 0.0
  %vm2578 = vcmp.gt.f32.partialorder %v2504, 0.0
  %vm2579 = vcmp.gt.f32.partialorder %v2506, 0.0
  %vm2580 = vcmp.gt.f32.partialorder %v2508, 0.0
  %vm2581 = vcmp.gt.f32.partialorder %v2510, 0.0
  %vm2582 = vcmp.gt.f32.partialorder %v2514, 0.0
  %vm2583 = vcmp.gt.f32.partialorder %v2516, 0.0
  %vm2584 = vcmp.gt.f32.partialorder %v2518, 0.0
  %vm2585 = vcmp.gt.f32.partialorder %v2520, 0.0
  %v2586 = vmul.f32 %v2364, 0.2
  %v2587 = vmul.f32 %v2366, 0.2
  %v2588 = vmul.f32 %v2368, 0.2
  %v2589 = vmul.f32 %v2370, 0.2
  %v2590 = vmul.f32 %v2374, 0.2
  %v2591 = vmul.f32 %v2376, 0.2
  %v2592 = vmul.f32 %v2378, 0.2
  %v2593 = vmul.f32 %v2380, 0.2
  %v2594 = vmul.f32 %v2384, 0.2
  %v2595 = vmul.f32 %v2386, 0.2
  %v2596 = vmul.f32 %v2388, 0.2
  %v2597 = vmul.f32 %v2390, 0.2
  %v2598 = vmul.f32 %v2394, 0.2
  %v2599 = vmul.f32 %v2396, 0.2
  %v2600 = vmul.f32 %v2398, 0.2
  %v2601 = vmul.f32 %v2400, 0.2
  %v2602 = vmul.f32 %v2404, 0.2
  %v2603 = vmul.f32 %v2406, 0.2
  %v2604 = vmul.f32 %v2408, 0.2
  %v2605 = vmul.f32 %v2410, 0.2
  %v2606 = vmul.f32 %v2414, 0.2
  %v2607 = vmul.f32 %v2416, 0.2
  %v2608 = vmul.f32 %v2418, 0.2
  %v2609 = vmul.f32 %v2420, 0.2
  %v2610 = vmul.f32 %v2424, 0.2
  %v2611 = vmul.f32 %v2426, 0.2
  %v2612 = vmul.f32 %v2428, 0.2
  %v2613 = vmul.f32 %v2430, 0.2
  %v2614 = vmul.f32 %v2434, 0.2
  %v2615 = vmul.f32 %v2436, 0.2
  %v2616 = vmul.f32 %v2438, 0.2
  %v2617 = vmul.f32 %v2440, 0.2
  %v2618 = vmul.f32 %v2444, 0.2
  %v2619 = vmul.f32 %v2446, 0.2
  %v2620 = vmul.f32 %v2448, 0.2
  %v2621 = vmul.f32 %v2450, 0.2
  %v2622 = vmul.f32 %v2454, 0.2
  %v2623 = vmul.f32 %v2456, 0.2
  %v2624 = vmul.f32 %v2458, 0.2
  %v2625 = vmul.f32 %v2460, 0.2
  %v2626 = vmul.f32 %v2464, 0.2
  %v2627 = vmul.f32 %v2466, 0.2
  %v2628 = vmul.f32 %v2468, 0.2
  %v2629 = vmul.f32 %v2470, 0.2
  %v2630 = vmul.f32 %v2474, 0.2
  %v2631 = vmul.f32 %v2476, 0.2
  %v2632 = vmul.f32 %v2478, 0.2
  %v2633 = vmul.f32 %v2480, 0.2
  %v2634 = vmul.f32 %v2484, 0.2
  %v2635 = vmul.f32 %v2486, 0.2
  %v2636 = vmul.f32 %v2488, 0.2
  %v2637 = vmul.f32 %v2490, 0.2
  %v2638 = vmul.f32 %v2494, 0.2
  %v2639 = vmul.f32 %v2496, 0.2
  %v2640 = vmul.f32 %v2498, 0.2
  %v2641 = vmul.f32 %v2500, 0.2
  %v2642 = vmul.f32 %v2504, 0.2
  %v2643 = vmul.f32 %v2506, 0.2
  %v2644 = vmul.f32 %v2508, 0.2
  %v2645 = vmul.f32 %v2510, 0.2
  %v2646 = vmul.f32 %v2514, 0.2
  %v2647 = vmul.f32 %v2516, 0.2
  %v2648 = vmul.f32 %v2518, 0.2
  %v2649 = vmul.f32 %v2520, 0.2
  %v2650 = vsel %vm2522, %v2364, %v2586
  %v2651 = vsel %vm2523, %v2366, %v2587
  %v2652 = vsel %vm2524, %v2368, %v2588
  %v2653 = vsel %vm2525, %v2370, %v2589
  %v2654 = vsel %vm2526, %v2374, %v2590
  %v2655 = vsel %vm2527, %v2376, %v2591
  %v2656 = vsel %vm2528, %v2378, %v2592
  %v2657 = vsel %vm2529, %v2380, %v2593
  %v2658 = vsel %vm2530, %v2384, %v2594
  %v2659 = vsel %vm2531, %v2386, %v2595
  %v2660 = vsel %vm2532, %v2388, %v2596
  %v2661 = vsel %vm2533, %v2390, %v2597
  %v2662 = vsel %vm2534, %v2394, %v2598
  %v2663 = vsel %vm2535, %v2396, %v2599
  %v2664 = vsel %vm2536, %v2398, %v2600
  %v2665 = vsel %vm2537, %v2400, %v2601
  %v2666 = vsel %vm2538, %v2404, %v2602
  %v2667 = vsel %vm2539, %v2406, %v2603
  %v2668 = vsel %vm2540, %v2408, %v2604
  %v2669 = vsel %vm2541, %v2410, %v2605
  %v2670 = vsel %vm2542, %v2414, %v2606
  %v2671 = vsel %vm2543, %v2416, %v2607
  %v2672 = vsel %vm2544, %v2418, %v2608
  %v2673 = vsel %vm2545, %v2420, %v2609
  %v2674 = vsel %vm2546, %v2424, %v2610
  %v2675 = vsel %vm2547, %v2426, %v2611
  %v2676 = vsel %vm2548, %v2428, %v2612
  %v2677 = vsel %vm2549, %v2430, %v2613
  %v2678 = vsel %vm2550, %v2434, %v2614
  %v2679 = vsel %vm2551, %v2436, %v2615
  %v2680 = vsel %vm2552, %v2438, %v2616
  %v2681 = vsel %vm2553, %v2440, %v2617
  %v2682 = vsel %vm2554, %v2444, %v2618
  %v2683 = vsel %vm2555, %v2446, %v2619
  %v2684 = vsel %vm2556, %v2448, %v2620
  %v2685 = vsel %vm2557, %v2450, %v2621
  %v2686 = vsel %vm2558, %v2454, %v2622
  %v2687 = vsel %vm2559, %v2456, %v2623
  %v2688 = vsel %vm2560, %v2458, %v2624
  %v2689 = vsel %vm2561, %v2460, %v2625
  %v2690 = vsel %vm2562, %v2464, %v2626
  %v2691 = vsel %vm2563, %v2466, %v2627
  %v2692 = vsel %vm2564, %v2468, %v2628
  %v2693 = vsel %vm2565, %v2470, %v2629
  %v2694 = vsel %vm2566, %v2474, %v2630
  %v2695 = vsel %vm2567, %v2476, %v2631
  %v2696 = vsel %vm2568, %v2478, %v2632
  %v2697 = vsel %vm2569, %v2480, %v2633
  %v2698 = vsel %vm2570, %v2484, %v2634
  %v2699 = vsel %vm2571, %v2486, %v2635
  %v2700 = vsel %vm2572, %v2488, %v2636
  %v2701 = vsel %vm2573, %v2490, %v2637
  %v2702 = vsel %vm2574, %v2494, %v2638
  %v2703 = vsel %vm2575, %v2496, %v2639
  %v2704 = vsel %vm2576, %v2498, %v2640
  %v2705 = vsel %vm2577, %v2500, %v2641
  %v2706 = vsel %vm2578, %v2504, %v2642
  %v2707 = vsel %vm2579, %v2506, %v2643
  %v2708 = vsel %vm2580, %v2508, %v2644
  %v2709 = vsel %vm2581, %v2510, %v2645
  %v2710 = vsel %vm2582, %v2514, %v2646
  %v2711 = vsel %vm2583, %v2516, %v2647
  %v2712 = vsel %vm2584, %v2518, %v2648
  %v2713 = vsel %vm2585, %v2520, %v2649
  %2714 = vset.pattern.permute.xlu0 2
  %2715 = vperm.xlu0 %2714, %v70
  %v2716 = vpop.permute.xlu0 %2715
  %2718 = vset.pattern.permute.xlu0 2
  %2719 = vperm.xlu0 %2718, %v71
  %v2720 = vpop.permute.xlu0 %2719
  %2722 = vset.pattern.permute.xlu0 2
  %2723 = vperm.xlu0 %2722, %v72
  %v2724 = vpop.permute.xlu0 %2723
  %2726 = vset.pattern.permute.xlu0 2
  %2727 = vperm.xlu0 %2726, %v73
  %v2728 = vpop.permute.xlu0 %2727
  %2730 = vset.pattern.permute.xlu0 2
  %2731 = vperm.xlu0 %2730, %v74
  %v2732 = vpop.permute.xlu0 %2731
  %2734 = vset.pattern.permute.xlu0 2
  %2735 = vperm.xlu0 %2734, %v75
  %v2736 = vpop.permute.xlu0 %2735
  %2738 = vset.pattern.permute.xlu0 2
  %2739 = vperm.xlu0 %2738, %v76
  %v2740 = vpop.permute.xlu0 %2739
  %2742 = vset.pattern.permute.xlu0 2
  %2743 = vperm.xlu0 %2742, %v77
  %v2744 = vpop.permute.xlu0 %2743
  %2746 = vset.pattern.permute.xlu0 2
  %2747 = vperm.xlu0 %2746, %v78
  %v2748 = vpop.permute.xlu0 %2747
  %2750 = vset.pattern.permute.xlu0 2
  %2751 = vperm.xlu0 %2750, %v79
  %v2752 = vpop.permute.xlu0 %2751
  %2754 = vset.pattern.permute.xlu0 2
  %2755 = vperm.xlu0 %2754, %v80
  %v2756 = vpop.permute.xlu0 %2755
  %2758 = vset.pattern.permute.xlu0 2
  %2759 = vperm.xlu0 %2758, %v81
  %v2760 = vpop.permute.xlu0 %2759
  %2762 = vset.pattern.permute.xlu0 2
  %2763 = vperm.xlu0 %2762, %v82
  %v2764 = vpop.permute.xlu0 %2763
  %2766 = vset.pattern.permute.xlu0 2
  %2767 = vperm.xlu0 %2766, %v83
  %v2768 = vpop.permute.xlu0 %2767
  %2770 = vset.pattern.permute.xlu0 2
  %2771 = vperm.xlu0 %2770, %v84
  %v2772 = vpop.permute.xlu0 %2771
  %2774 = vset.pattern.permute.xlu0 2
  %2775 = vperm.xlu0 %2774, %v85
  %v2776 = vpop.permute.xlu0 %2775
  %2778 = vset.pattern.permute.xlu0 2
  %2779 = vperm.xlu0 %2778, %v86
  %v2780 = vpop.permute.xlu0 %2779
  %2782 = vset.pattern.permute.xlu0 2
  %2783 = vperm.xlu0 %2782, %v87
  %v2784 = vpop.permute.xlu0 %2783
  %2786 = vset.pattern.permute.xlu0 2
  %2787 = vperm.xlu0 %2786, %v88
  %v2788 = vpop.permute.xlu0 %2787
  %2790 = vset.pattern.permute.xlu0 2
  %2791 = vperm.xlu0 %2790, %v89
  %v2792 = vpop.permute.xlu0 %2791
  %2794 = vset.pattern.permute.xlu0 2
  %2795 = vperm.xlu0 %2794, %v90
  %v2796 = vpop.permute.xlu0 %2795
  %2798 = vset.pattern.permute.xlu0 2
  %2799 = vperm.xlu0 %2798, %v91
  %v2800 = vpop.permute.xlu0 %2799
  %2802 = vset.pattern.permute.xlu0 2
  %2803 = vperm.xlu0 %2802, %v92
  %v2804 = vpop.permute.xlu0 %2803
  %2806 = vset.pattern.permute.xlu0 2
  %2807 = vperm.xlu0 %2806, %v93
  %v2808 = vpop.permute.xlu0 %2807
  %2810 = vset.pattern.permute.xlu0 2
  %2811 = vperm.xlu0 %2810, %v94
  %v2812 = vpop.permute.xlu0 %2811
  %2814 = vset.pattern.permute.xlu0 2
  %2815 = vperm.xlu0 %2814, %v95
  %v2816 = vpop.permute.xlu0 %2815
  %2818 = vset.pattern.permute.xlu0 2
  %2819 = vperm.xlu0 %2818, %v96
  %v2820 = vpop.permute.xlu0 %2819
  %2822 = vset.pattern.permute.xlu0 2
  %2823 = vperm.xlu0 %2822, %v97
  %v2824 = vpop.permute.xlu0 %2823
  %2826 = vset.pattern.permute.xlu0 2
  %2827 = vperm.xlu0 %2826, %v98
  %v2828 = vpop.permute.xlu0 %2827
  %2830 = vset.pattern.permute.xlu0 2
  %2831 = vperm.xlu0 %2830, %v99
  %v2832 = vpop.permute.xlu0 %2831
  %2834 = vset.pattern.permute.xlu0 2
  %2835 = vperm.xlu0 %2834, %v100
  %v2836 = vpop.permute.xlu0 %2835
  %2838 = vset.pattern.permute.xlu0 2
  %2839 = vperm.xlu0 %2838, %v101
  %v2840 = vpop.permute.xlu0 %2839
  %v2842 = vmul.f32 %v2650, %v2716
  %v2843 = vmul.f32 %v2651, %v2716
  %v2844 = vmul.f32 %v2652, %v2720
  %v2845 = vmul.f32 %v2653, %v2720
  %v2846 = vmul.f32 %v2654, %v2724
  %v2847 = vmul.f32 %v2655, %v2724
  %v2848 = vmul.f32 %v2656, %v2728
  %v2849 = vmul.f32 %v2657, %v2728
  %v2850 = vmul.f32 %v2658, %v2732
  %v2851 = vmul.f32 %v2659, %v2732
  %v2852 = vmul.f32 %v2660, %v2736
  %v2853 = vmul.f32 %v2661, %v2736
  %v2854 = vmul.f32 %v2662, %v2740
  %v2855 = vmul.f32 %v2663, %v2740
  %v2856 = vmul.f32 %v2664, %v2744
  %v2857 = vmul.f32 %v2665, %v2744
  %v2858 = vmul.f32 %v2666, %v2748
  %v2859 = vmul.f32 %v2667, %v2748
  %v2860 = vmul.f32 %v2668, %v2752
  %v2861 = vmul.f32 %v2669, %v2752
  %v2862 = vmul.f32 %v2670, %v2756
  %v2863 = vmul.f32 %v2671, %v2756
  %v2864 = vmul.f32 %v2672, %v2760
  %v2865 = vmul.f32 %v2673, %v2760
  %v2866 = vmul.f32 %v2674, %v2764
  %v2867 = vmul.f32 %v2675, %v2764
  %v2868 = vmul.f32 %v2676, %v2768
  %v2869 = vmul.f32 %v2677, %v2768
  %v2870 = vmul.f32 %v2678, %v2772
  %v2871 = vmul.f32 %v2679, %v2772
  %v2872 = vmul.f32 %v2680, %v2776
  %v2873 = vmul.f32 %v2681, %v2776
  %v2874 = vmul.f32 %v2682, %v2780
  %v2875 = vmul.f32 %v2683, %v2780
  %v2876 = vmul.f32 %v2684, %v2784
  %v2877 = vmul.f32 %v2685, %v2784
  %v2878 = vmul.f32 %v2686, %v2788
  %v2879 = vmul.f32 %v2687, %v2788
  %v2880 = vmul.f32 %v2688, %v2792
  %v2881 = vmul.f32 %v2689, %v2792
  %v2882 = vmul.f32 %v2690, %v2796
  %v2883 = vmul.f32 %v2691, %v2796
  %v2884 = vmul.f32 %v2692, %v2800
  %v2885 = vmul.f32 %v2693, %v2800
  %v2886 = vmul.f32 %v2694, %v2804
  %v2887 = vmul.f32 %v2695, %v2804
  %v2888 = vmul.f32 %v2696, %v2808
  %v2889 = vmul.f32 %v2697, %v2808
  %v2890 = vmul.f32 %v2698, %v2812
  %v2891 = vmul.f32 %v2699, %v2812
  %v2892 = vmul.f32 %v2700, %v2816
  %v2893 = vmul.f32 %v2701, %v2816
  %v2894 = vmul.f32 %v2702, %v2820
  %v2895 = vmul.f32 %v2703, %v2820
  %v2896 = vmul.f32 %v2704, %v2824
  %v2897 = vmul.f32 %v2705, %v2824
  %v2898 = vmul.f32 %v2706, %v2828
  %v2899 = vmul.f32 %v2707, %v2828
  %v2900 = vmul.f32 %v2708, %v2832
  %v2901 = vmul.f32 %v2709, %v2832
  %v2902 = vmul.f32 %v2710, %v2836
  %v2903 = vmul.f32 %v2711, %v2836
  %v2904 = vmul.f32 %v2712, %v2840
  %v2905 = vmul.f32 %v2713, %v2840
  %v2906 = vadd.f32 %v2842, %v2844
  %v2907 = vadd.f32 %v2906, %v2846
  %v2908 = vadd.f32 %v2907, %v2848
  %v2909 = vadd.f32 %v2908, %v2850
  %v2910 = vadd.f32 %v2909, %v2852
  %v2911 = vadd.f32 %v2910, %v2854
  %v2912 = vadd.f32 %v2911, %v2856
  %v2913 = vadd.f32 %v2912, %v2858
  %v2914 = vadd.f32 %v2913, %v2860
  %v2915 = vadd.f32 %v2914, %v2862
  %v2916 = vadd.f32 %v2915, %v2864
  %v2917 = vadd.f32 %v2916, %v2866
  %v2918 = vadd.f32 %v2917, %v2868
  %v2919 = vadd.f32 %v2918, %v2870
  %v2920 = vadd.f32 %v2919, %v2872
  %v2921 = vadd.f32 %v2920, %v2874
  %v2922 = vadd.f32 %v2921, %v2876
  %v2923 = vadd.f32 %v2922, %v2878
  %v2924 = vadd.f32 %v2923, %v2880
  %v2925 = vadd.f32 %v2924, %v2882
  %v2926 = vadd.f32 %v2925, %v2884
  %v2927 = vadd.f32 %v2926, %v2886
  %v2928 = vadd.f32 %v2927, %v2888
  %v2929 = vadd.f32 %v2928, %v2890
  %v2930 = vadd.f32 %v2929, %v2892
  %v2931 = vadd.f32 %v2930, %v2894
  %v2932 = vadd.f32 %v2931, %v2896
  %v2933 = vadd.f32 %v2932, %v2898
  %v2934 = vadd.f32 %v2933, %v2900
  %v2935 = vadd.f32 %v2934, %v2902
  %v2936 = vadd.f32 %v2935, %v2904
  %v2937 = vrot.slane %v2936, 4
  %v2938 = vadd.f32 %v2936, %v2937
  %v2939 = vrot.slane %v2938, 2
  %v2940 = vadd.f32 %v2938, %v2939
  %v2941 = vrot.slane %v2940, 1
  %v2942 = vadd.f32 %v2940, %v2941
  %v2943 = vadd.f32 %v2843, %v2845
  %v2944 = vadd.f32 %v2943, %v2847
  %v2945 = vadd.f32 %v2944, %v2849
  %v2946 = vadd.f32 %v2945, %v2851
  %v2947 = vadd.f32 %v2946, %v2853
  %v2948 = vadd.f32 %v2947, %v2855
  %v2949 = vadd.f32 %v2948, %v2857
  %v2950 = vadd.f32 %v2949, %v2859
  %v2951 = vadd.f32 %v2950, %v2861
  %v2952 = vadd.f32 %v2951, %v2863
  %v2953 = vadd.f32 %v2952, %v2865
  %v2954 = vadd.f32 %v2953, %v2867
  %v2955 = vadd.f32 %v2954, %v2869
  %v2956 = vadd.f32 %v2955, %v2871
  %v2957 = vadd.f32 %v2956, %v2873
  %v2958 = vadd.f32 %v2957, %v2875
  %v2959 = vadd.f32 %v2958, %v2877
  %v2960 = vadd.f32 %v2959, %v2879
  %v2961 = vadd.f32 %v2960, %v2881
  %v2962 = vadd.f32 %v2961, %v2883
  %v2963 = vadd.f32 %v2962, %v2885
  %v2964 = vadd.f32 %v2963, %v2887
  %v2965 = vadd.f32 %v2964, %v2889
  %v2966 = vadd.f32 %v2965, %v2891
  %v2967 = vadd.f32 %v2966, %v2893
  %v2968 = vadd.f32 %v2967, %v2895
  %v2969 = vadd.f32 %v2968, %v2897
  %v2970 = vadd.f32 %v2969, %v2899
  %v2971 = vadd.f32 %v2970, %v2901
  %v2972 = vadd.f32 %v2971, %v2903
  %v2973 = vadd.f32 %v2972, %v2905
  %v2974 = vrot.slane %v2973, 4
  %v2975 = vadd.f32 %v2973, %v2974
  %v2976 = vrot.slane %v2975, 2
  %v2977 = vadd.f32 %v2975, %v2976
  %v2978 = vrot.slane %v2977, 1
  %v2979 = vadd.f32 %v2977, %v2978
  %s2980 = sld [smem:[#allocation2]]
  %v2981 = vstv %s2980
  %v2982 = vadd.f32 %v2942, %v2981
  %v2983 = vadd.f32 %v2979, %v2981
  %v2984 = vxor.u32 %v2982, 2147483648
  %v2985 = vxor.u32 %v2983, 2147483648
  %v2986 = vmul.f32 %v2984, 1.442695
  %v2987 = vpow.pop %v2986
  %v2988 = vmul.f32 %v2985, 1.442695
  %v2989 = vpow.pop %v2988
  %v2990 = vadd.f32 %v2987, 1.0
  %v2991 = vadd.f32 %v2989, 1.0
  %v2992 = vrcp.pop %v2990
  %v2993 = vmul.f32 1.0, %v2992
  %v2994 = vrcp.pop %v2991
  %v2995 = vmul.f32 1.0, %v2994
  %v2998 = vcombine.low %v2993, %v2995
  %v3000 = vunpack.c.l.s4 1966171168
  %v3001 = vunpack.c.0.s8 %v3000
  %v3002 = vlaneseq
  %v3003 = vshrl.u32 %v3002, 7
  %v3004 = vsub.s32 %v3001, %v3003
  %v3005 = vrot.slane %v2998, %v3004
  %v3007 = vunpack.c.l.s4 1966171168
  %v3008 = vunpack.c.0.s8 %v3007
  %v3009 = vlaneseq
  %v3010 = vshrl.u32 %v3009, 7
  %v3011 = vsub.s32 %v3008, %v3010
  %v3012 = vrot.slane %v3005, %v3011
  %v3014 = vlaneseq
  %vm3015 = vcmp.ge.s32.totalorder %v3014, 0
  %vm3016 = vcmp.lt.s32.totalorder %v3014, 256
  %vm3017 = vmand %vm3015, %vm3016
  %3018 = vst.msk [vmem:[%s5] sm:$0x3] %vm3017, %v3012
  // Predicated region
  $region22: #{discriminator_forward.1} parent=0 // pred_check
    _
  $region23: #{discriminator_forward.1} parent=0 // pred_check_branch
    %3020 = sbr.rel (0) target = $region25
  $region24: #{discriminator_forward.1} parent=0 // pred_region
    _
  $region25: #{discriminator_forward.1} parent=0 // pred_fallthru
    _
  // Predicated region
  $region26: #{discriminator_forward.1} parent=0 // pred_check
    _
  $region27: #{discriminator_forward.1} parent=0 // pred_check_branch
    %3022 = sbr.rel (0) target = $region29
  $region28: #{discriminator_forward.1} parent=0 // pred_region
    _
  $region29: #{discriminator_forward.1} parent=0 // pred_fallthru
    _

</llo_original>
